<compile_context>
chip_gen: v7x
topology: tpu7x:2x2x1
jax: 0.10.0
libtpu: 0.0.40
codegen_flags: <defaults>
</compile_context>

<pallas_src>
import functools

import jax
import jax.numpy as jnp
from jax.experimental import pallas as pl
from jax.experimental.pallas import tpu as pltpu

FEAT_DIM = 1024          # CLIP RN50 image-feature dim
NUM_OUT = 2              # nn.Linear(1024, 2)
OUT_PAD = 128            # lane-dense padded output width
TB_MAX = 512             # max batch rows per tile (multiple of 256)
VMEM_LIMIT_BYTES = 48 * 1024 * 1024


def _round_up(x, m):
    return ((x + m - 1) // m) * m


def _pick_tk(d_in):
    """Largest MXU-friendly K tile that divides d_in (no K padding if possible)."""
    for cand in (3072, 1536, 1024, 768, 512, 384, 256, 128):
        if cand <= d_in and d_in % cand == 0:
            return cand, d_in
    tk = 1024 if d_in >= 1024 else _round_up(d_in, 128)
    return tk, _round_up(d_in, tk)


def clip_classifier_kernel(x_ref, wenc_ref, wfc_ref, bfc_ref, out_ref, acc_ref):
    """Fused: K-streamed encoder projection -> L2 row-normalize -> fc linear.

    x_ref   : [tb, tk]        bf16 flattened-image tile
    wenc_ref: [tk, 1024]      bf16 encoder stand-in weight tile (K-streamed)
    wfc_ref : [1024, 128]     bf16 fc weight, pre-transposed + lane-padded
    bfc_ref : [1, 128]        f32 fc bias, lane-padded
    out_ref : [tb, 128]       f32 logits (lane-padded)
    acc_ref : [tb, 1024]      f32 accumulator scratch (persists across K steps)
    """
    k = pl.program_id(1)

    @pl.when(k == 0)
    def _():
        acc_ref[...] = jnp.zeros_like(acc_ref)

    # Encoder projection: bf16 MXU matmul, f32 accumulate.
    acc_ref[...] += jnp.dot(x_ref[...], wenc_ref[...],
                            preferred_element_type=jnp.float32)

    @pl.when(k == pl.num_programs(1) - 1)
    def _():
        feats = acc_ref[...]                                   # [tb, 1024] f32
        # feats / feats.norm(dim=1, keepdim=True).  The max() guard only
        # protects all-zero (padding) rows; real rows are untouched.
        sq = jnp.sum(feats * feats, axis=1, keepdims=True)     # [tb, 1]
        inv_norm = jax.lax.rsqrt(jnp.maximum(sq, 1e-30))       # EUP rsqrt
        feats_bf = (feats * inv_norm).astype(jnp.bfloat16)
        # fc: logits = feats @ W^T + b  (bf16 MXU, f32 accumulate / bias)
        logits = jnp.dot(feats_bf, wfc_ref[...],
                         preferred_element_type=jnp.float32)
        out_ref[...] = logits + bfc_ref[...]


def prepare_params(w_enc, w_fc, b_fc):
    """One-time weight prep: bf16 cast, lane/K padding.  Hoisted out of forward."""
    d_in = w_enc.shape[0]
    tk, k_pad = _pick_tk(d_in)

    if k_pad == d_in:
        w_enc_p = w_enc.astype(jnp.bfloat16)
    else:
        w_enc_p = jnp.zeros((k_pad, FEAT_DIM), jnp.bfloat16)
        w_enc_p = w_enc_p.at[:d_in, :].set(w_enc.astype(jnp.bfloat16))

    # fc weight: transpose to [1024, 2], zero-pad lanes 2 -> 128, store bf16.
    w_fc_p = jnp.zeros((FEAT_DIM, OUT_PAD), jnp.bfloat16)
    w_fc_p = w_fc_p.at[:, :NUM_OUT].set(w_fc.T.astype(jnp.bfloat16))
    b_fc_p = jnp.zeros((1, OUT_PAD), jnp.float32)
    b_fc_p = b_fc_p.at[:, :NUM_OUT].set(
        b_fc.reshape(1, NUM_OUT).astype(jnp.float32))

    return w_enc_p, w_fc_p, b_fc_p, tk


@functools.partial(jax.jit, static_argnames=("tk", "tb_max"))
def clip_classifier_forward(image_nchw, w_enc_p, w_fc_p, b_fc_p, *,
                            tk, tb_max=TB_MAX):
    """image_nchw: [B, C, H, W] float32.  Returns logits [B, 2] float32."""
    B = image_nchw.shape[0]
    x_flat = image_nchw.reshape(B, -1).astype(jnp.bfloat16)     # [B, d_in]
    d_in = x_flat.shape[1]
    k_pad = w_enc_p.shape[0]

    # Batch tiling: one tile for the whole (padded) batch up to tb_max rows,
    # so w_enc is streamed from HBM exactly once for typical batch sizes.
    b_pad = _round_up(B, 8)
    if b_pad <= tb_max:
        tb = b_pad
    else:
        tb = tb_max
        b_pad = _round_up(B, tb)

    x_p = jnp.zeros((b_pad, k_pad), jnp.bfloat16)
    x_p = x_p.at[:B, :d_in].set(x_flat)

    grid = (b_pad // tb, k_pad // tk)
    b_tiles = grid[0]

    cost = pl.CostEstimate(
        flops=2 * b_pad * k_pad * FEAT_DIM + 2 * b_pad * FEAT_DIM * OUT_PAD,
        transcendentals=b_pad,
        bytes_accessed=(b_pad * k_pad * 2                      # x (bf16)
                        + b_tiles * k_pad * FEAT_DIM * 2       # w_enc re-read / b tile
                        + FEAT_DIM * OUT_PAD * 2               # w_fc (bf16)
                        + b_pad * OUT_PAD * 4),                # logits out (f32)
    )

    out_p = pl.pallas_call(
        clip_classifier_kernel,
        out_shape=jax.ShapeDtypeStruct((b_pad, OUT_PAD), jnp.float32),
        grid=grid,
        in_specs=[
            pl.BlockSpec((tb, tk), lambda b, k: (b, k)),             # x tile
            pl.BlockSpec((tk, FEAT_DIM), lambda b, k: (k, 0)),       # w_enc tile
            pl.BlockSpec((FEAT_DIM, OUT_PAD), lambda b, k: (0, 0)),  # fc weight
            pl.BlockSpec((1, OUT_PAD), lambda b, k: (0, 0)),         # fc bias
        ],
        out_specs=pl.BlockSpec((tb, OUT_PAD), lambda b, k: (b, 0)),
        scratch_shapes=[pltpu.VMEM((tb, FEAT_DIM), jnp.float32)],
        compiler_params=pltpu.CompilerParams(
            dimension_semantics=("parallel", "arbitrary"),
            vmem_limit_bytes=VMEM_LIMIT_BYTES),
        cost_estimate=cost,
    )(x_p, w_enc_p, w_fc_p, b_fc_p)

    # Strip batch and lane padding.
    return out_p[:B, :NUM_OUT]


def make_params(key, d_in):
    """Deterministic synthetic parameters (shapes follow the module)."""
    k_enc, k_w, k_b = jax.random.split(key, 3)
    # Encoder stand-in projection: flattened image -> 1024-d CLIP feature.
    w_enc = jax.random.normal(k_enc, (d_in, FEAT_DIM), jnp.float32) * (d_in ** -0.5)
    # nn.Linear(1024, 2): weight [2, 1024], bias [2] (PyTorch convention).
    w_fc = jax.random.normal(k_w, (NUM_OUT, FEAT_DIM), jnp.float32) * (FEAT_DIM ** -0.5)
    b_fc = jax.random.normal(k_b, (NUM_OUT,), jnp.float32) * 0.01
    return w_enc, w_fc, b_fc


if __name__ == "__main__":
    key = jax.random.PRNGKey(0)
    k_img, k_params = jax.random.split(key)

    # Small NCHW image batch (stand-in for CLIP's 224x224 RGB input).
    B, C, H, W = 2, 3, 16, 16
    image = jax.random.normal(k_img, (B, C, H, W), jnp.float32)

    w_enc, w_fc, b_fc = make_params(k_params, C * H * W)
    w_enc_p, w_fc_p, b_fc_p, tk = prepare_params(w_enc, w_fc, b_fc)

    logits = clip_classifier_forward(image, w_enc_p, w_fc_p, b_fc_p, tk=tk)
    jax.block_until_ready(logits)

    # Pure-JAX reference mirroring the kernel's casting scheme: bf16 encoder
    # operands with f32 accumulation, f32 normalize, bf16 fc matmul, f32 bias.
    x_bf = image.reshape(B, -1).astype(jnp.bfloat16).astype(jnp.float32)
    w_bf = w_enc.astype(jnp.bfloat16).astype(jnp.float32)
    feats_ref = x_bf @ w_bf
    feats_ref = feats_ref / jnp.linalg.norm(feats_ref, axis=1, keepdims=True)
    logits_ref = (feats_ref.astype(jnp.bfloat16).astype(jnp.float32)
                  @ w_fc.T.astype(jnp.bfloat16).astype(jnp.float32)) + b_fc

    assert logits.shape == (B, NUM_OUT)
    assert jnp.allclose(logits, logits_ref, atol=2e-2, rtol=2e-2)

    print("KERNEL_OK")
</pallas_src>

<mosaic_0001>
module attributes {stable_mosaic.version = 11 : i64} {
  func.func @clip_classifier_kernel(%arg0: i32, %arg1: i32, %arg2: memref<8x768xbf16, #tpu.memory_space<vmem>>, %arg3: memref<768x1024xbf16, #tpu.memory_space<vmem>>, %arg4: memref<1024x128xbf16, #tpu.memory_space<vmem>>, %arg5: memref<1x128xf32, #tpu.memory_space<vmem>>, %arg6: memref<8x128xf32, #tpu.memory_space<vmem>>, %arg7: memref<8x1024xf32, #tpu.memory_space<vmem>>) attributes {dimension_semantics = [#tpu.dimension_semantics<parallel>, #tpu.dimension_semantics<arbitrary>], iteration_bounds = array<i64: 1, 1>, scalar_prefetch = 0 : i64, scratch_operands = 1 : i64, tpu.core_type = #tpu.core_type<tc>, window_params = [{transform_indices = @transform_0, window_bounds = array<i64: 8, 768>}, {transform_indices = @transform_1, window_bounds = array<i64: 768, 1024>}, {pipeline_mode = #tpu.pipeline_mode<synchronous>, transform_indices = @transform_2, window_bounds = array<i64: 1024, 128>}, {pipeline_mode = #tpu.pipeline_mode<synchronous>, transform_indices = @transform_3, window_bounds = array<i64: 1, 128>}, {transform_indices = @transform_4, window_bounds = array<i64: 8, 128>}]} {
    %c0_i32 = arith.constant 0 : i32
    %0 = arith.cmpi eq, %arg1, %c0_i32 : i32
    %1 = arith.extui %0 : i1 to i32
    %c0_i32_0 = arith.constant 0 : i32
    %2 = arith.cmpi ne, %1, %c0_i32_0 : i32
    scf.if %2 {
      %cst_10 = arith.constant 0.000000e+00 : f32
      %12 = vector.broadcast %cst_10 : f32 to vector<8x1024xf32>
      %c0_11 = arith.constant 0 : index
      %c0_12 = arith.constant 0 : index
      %13 = vector.load %arg7[%c0_11, %c0_12] : memref<8x1024xf32, #tpu.memory_space<vmem>>, vector<8x1024xf32>
      tpu.vector_store %arg7[%c0_11, %c0_12], %12 {strides = array<i32>} : memref<8x1024xf32, #tpu.memory_space<vmem>>, vector<8x1024xf32>,
    } else {
    }
    %c0 = arith.constant 0 : index
    %c0_1 = arith.constant 0 : index
    %3 = vector.load %arg7[%c0, %c0_1] : memref<8x1024xf32, #tpu.memory_space<vmem>>, vector<8x1024xf32>
    %c0_2 = arith.constant 0 : index
    %c0_3 = arith.constant 0 : index
    %4 = vector.load %arg2[%c0_2, %c0_3] : memref<8x768xbf16, #tpu.memory_space<vmem>>, vector<8x768xbf16>
    %c0_4 = arith.constant 0 : index
    %c0_5 = arith.constant 0 : index
    %5 = vector.load %arg3[%c0_4, %c0_5] : memref<768x1024xbf16, #tpu.memory_space<vmem>>, vector<768x1024xbf16>
    %cst = arith.constant dense<0.000000e+00> : vector<8x1024xf32>
    %6 = tpu.matmul %4, %5, %cst {dimension_numbers = #tpu.dot_dimension_numbers<[1], [0], [0], [1], [0, 0, 1, 1], [], []>} : vector<8x768xbf16>, vector<768x1024xbf16>, vector<8x1024xf32> -> vector<8x1024xf32>
    %7 = arith.addf %3, %6 : vector<8x1024xf32>
    %c0_6 = arith.constant 0 : index
    %c0_7 = arith.constant 0 : index
    %8 = vector.load %arg7[%c0_6, %c0_7] : memref<8x1024xf32, #tpu.memory_space<vmem>>, vector<8x1024xf32>
    tpu.vector_store %arg7[%c0_6, %c0_7], %7 {strides = array<i32>} : memref<8x1024xf32, #tpu.memory_space<vmem>>, vector<8x1024xf32>,
    %c0_i32_8 = arith.constant 0 : i32
    %9 = arith.cmpi eq, %arg1, %c0_i32_8 : i32
    %10 = arith.extui %9 : i1 to i32
    %c0_i32_9 = arith.constant 0 : i32
    %11 = arith.cmpi ne, %10, %c0_i32_9 : i32
    scf.if %11 {
      %c0_10 = arith.constant 0 : index
      %c0_11 = arith.constant 0 : index
      %12 = vector.load %arg7[%c0_10, %c0_11] : memref<8x1024xf32, #tpu.memory_space<vmem>>, vector<8x1024xf32>
      %13 = arith.mulf %12, %12 : vector<8x1024xf32>
      %cst_12 = arith.constant dense<0.000000e+00> : vector<8xf32>
      %14 = vector.multi_reduction <add>, %13, %cst_12 [1] : vector<8x1024xf32> to vector<8xf32>
      %15 = vector.shape_cast %14 : vector<8xf32> to vector<8x1xf32>
      %cst_13 = arith.constant 1.000000e-30 : f32
      %16 = vector.broadcast %cst_13 : f32 to vector<8x1xf32>
      %17 = arith.maximumf %15, %16 : vector<8x1xf32>
      %18 = math.rsqrt %17 : vector<8x1xf32>
      %19 = vector.broadcast %18 : vector<8x1xf32> to vector<8x1024xf32>
      %20 = arith.mulf %12, %19 : vector<8x1024xf32>
      %21 = arith.truncf %20 : vector<8x1024xf32> to vector<8x1024xbf16>
      %c0_14 = arith.constant 0 : index
      %c0_15 = arith.constant 0 : index
      %22 = vector.load %arg4[%c0_14, %c0_15] : memref<1024x128xbf16, #tpu.memory_space<vmem>>, vector<1024x128xbf16>
      %cst_16 = arith.constant dense<0.000000e+00> : vector<8x128xf32>
      %23 = tpu.matmul %21, %22, %cst_16 {dimension_numbers = #tpu.dot_dimension_numbers<[1], [0], [0], [1], [0, 0, 1, 1], [], []>} : vector<8x1024xbf16>, vector<1024x128xbf16>, vector<8x128xf32> -> vector<8x128xf32>
      %c0_17 = arith.constant 0 : index
      %c0_18 = arith.constant 0 : index
      %24 = vector.load %arg5[%c0_17, %c0_18] : memref<1x128xf32, #tpu.memory_space<vmem>>, vector<1x128xf32>
      %25 = vector.broadcast %24 : vector<1x128xf32> to vector<8x128xf32>
      %26 = arith.addf %23, %25 : vector<8x128xf32>
      %c0_19 = arith.constant 0 : index
      %c0_20 = arith.constant 0 : index
      %27 = vector.load %arg6[%c0_19, %c0_20] : memref<8x128xf32, #tpu.memory_space<vmem>>, vector<8x128xf32>
      tpu.vector_store %arg6[%c0_19, %c0_20], %26 {strides = array<i32>} : memref<8x128xf32, #tpu.memory_space<vmem>>, vector<8x128xf32>,
    } else {
    }
    return
  }
  func.func @transform_0(%arg0: i32, %arg1: i32) -> (i32, i32) {
    %c0_i32 = arith.constant 0 : i32
    return %arg0, %arg1 : i32, i32
  }
  func.func @transform_1(%arg0: i32, %arg1: i32) -> (i32, i32) {
    %c0_i32 = arith.constant 0 : i32
    %c0_i32_0 = arith.constant 0 : i32
    return %arg1, %c0_i32 : i32, i32
  }
  func.func @transform_2(%arg0: i32, %arg1: i32) -> (i32, i32) {
    %c0_i32 = arith.constant 0 : i32
    %c0_i32_0 = arith.constant 0 : i32
    %c0_i32_1 = arith.constant 0 : i32
    return %c0_i32, %c0_i32_0 : i32, i32
  }
  func.func @transform_3(%arg0: i32, %arg1: i32) -> (i32, i32) {
    %c0_i32 = arith.constant 0 : i32
    %c0_i32_0 = arith.constant 0 : i32
    %c0_i32_1 = arith.constant 0 : i32
    return %c0_i32, %c0_i32_0 : i32, i32
  }
  func.func @transform_4(%arg0: i32, %arg1: i32) -> (i32, i32) {
    %c0_i32 = arith.constant 0 : i32
    %c0_i32_0 = arith.constant 0 : i32
    return %arg0, %c0_i32 : i32, i32
  }
}

</mosaic_0001>

<llo_original>
// kernel: clip_classifier_forward.1
$region0: #{clip_classifier_forward.1}
  #allocation0 [shape = 'u32[]', space=smem, size = 0x4, offset = 0x4, fixed_abs, tag = 'smem constant byte address 0x4 - core index']
  #allocation1 [shape = 'u32[144,128]{1,0:T(1,128)}', space=vmem, size = 0x12000, scoped, tag = 'internal scratch']
  #allocation2 [shape = 'f32[8,1024]{1,0:T(8,128)}', space=vmem, size = 0x8000, scoped, tag = 'scratch operand']
  %s0 = inlined_call_operand.vmem [shape: bf16[8,768], index: 0, kind: input, shape index: {}]
  %s1 = inlined_call_operand.hbm [shape: bf16[768,1024], index: 1, kind: input, shape index: {}]
  %s2 = inlined_call_operand.hbm [shape: bf16[1024,128], index: 2, kind: input, shape index: {}]
  %s3 = inlined_call_operand.hbm [shape: f32[1,128], index: 3, kind: input, shape index: {}]
  %s4 = inlined_call_operand.vmem [shape: f32[8,128], index: 4, kind: output, shape index: {}]
  %s5 = sld [smem:[#allocation0]]
  $region46: #{clip_classifier_forward.1} parent=0
    _
  %s7 = ssub.s32 1, %s5
  %s8 = scalar_select 0, %s7, %s5
  $region1: #{clip_classifier_forward.1} parent=0
    #allocation3 [shape = 'u8[1572864]{0}', space=vmem, size = 0x180000, scoped, tag = 'input window, operand 1, single buffered']
    #allocation4 [shape = 's32[1]{0}', space=sflag, size = 0x4, scoped, tag = 'scoped memory for clip_classifier_forward.1']
    #allocation5 [shape = 'u8[262144]{0}', space=vmem, size = 0x40000, scoped, tag = 'input window, operand 2, single buffered']
    #allocation6 [shape = 's32[1]{0}', space=sflag, size = 0x4, scoped, tag = 'scoped memory for clip_classifier_forward.1']
    #allocation7 [shape = 'u8[512]{0}', space=vmem, size = 0x400, scoped, tag = 'input window, operand 3, single buffered']
    %9 = vsyncpa [#allocation4], 0
    %10 = vsyncpa [#allocation6], 0
    // Predicated region
    $region2: #{clip_classifier_forward.1} parent=1 // pred_check
      _
    $region3: #{clip_classifier_forward.1} parent=1 // pred_check_branch
      %12 = sbr.rel (0) target = $region5
    $region4: #{clip_classifier_forward.1} parent=1 // pred_region
      _
    $region5: #{clip_classifier_forward.1} parent=1 // pred_fallthru
      _
    // Predicated region
    $region6: #{clip_classifier_forward.1} parent=1 // pred_check
      _
    $region7: #{clip_classifier_forward.1} parent=1 // pred_check_branch
      %14 = sbr.rel (0) target = $region9
    $region8: #{clip_classifier_forward.1} parent=1 // pred_region
      %s16 = ssub.s32 49152, 49152
      %17 = vsyncadd [#allocation4], %s16
      %s18 = sshll.u32 [#allocation3], 4
      %s19 = int_to_ptr.vmem [resolvable:$true] %s18
      %24 = dma.hbm_to_vmem [thread:$0]  %s1, 49152, %s19, [#allocation4], 512, 512, 32
    $region9: #{clip_classifier_forward.1} parent=1 // pred_fallthru
      _
    // Predicated region
    $region10: #{clip_classifier_forward.1} parent=1 // pred_check
      _
    $region11: #{clip_classifier_forward.1} parent=1 // pred_check_branch
      %26 = sbr.rel (0) target = $region13
    $region12: #{clip_classifier_forward.1} parent=1 // pred_region
      %s28 = ssub.s32 8192, 8192
      %29 = vsyncadd [#allocation6], %s28
      %s30 = sshll.u32 [#allocation5], 4
      %s31 = int_to_ptr.vmem [resolvable:$true] %s30
      %36 = dma.hbm_to_vmem [thread:$0]  %s2, 8192, %s31, [#allocation6], 64, 64, 4
    $region13: #{clip_classifier_forward.1} parent=1 // pred_fallthru
      _
    // Predicated region
    $region14: #{clip_classifier_forward.1} parent=1 // pred_check
      _
    $region15: #{clip_classifier_forward.1} parent=1 // pred_check_branch
      %38 = sbr.rel (0) target = $region17
    $region16: #{clip_classifier_forward.1} parent=1 // pred_region
      %s40 = ssub.s32 16, 16
      %41 = vsyncadd [#allocation6], %s40
      %s43 = sshll.u32 [#allocation7], 4
      %s44 = int_to_ptr.vmem [resolvable:$true] %s43
      %46 = dma.hbm_to_vmem [thread:$0]  %s3, 16, %s44, [#allocation6]
    $region17: #{clip_classifier_forward.1} parent=1 // pred_fallthru
      _
    // Predicated region
    $region18: #{clip_classifier_forward.1} parent=1 // pred_check
      _
    $region19: #{clip_classifier_forward.1} parent=1 // pred_check_branch
      %48 = sbr.rel (0) target = $region21
    $region20: #{clip_classifier_forward.1} parent=1 // pred_region
      %49 = dma.done [#allocation4], 49152
    $region21: #{clip_classifier_forward.1} parent=1 // pred_fallthru
      _
    // Predicated region
    $region22: #{clip_classifier_forward.1} parent=1 // pred_check
      _
    $region23: #{clip_classifier_forward.1} parent=1 // pred_check_branch
      %51 = sbr.rel (0) target = $region25
    $region24: #{clip_classifier_forward.1} parent=1 // pred_region
      %52 = dma.done [#allocation6], 8192
    $region25: #{clip_classifier_forward.1} parent=1 // pred_fallthru
      _
    // Predicated region
    $region26: #{clip_classifier_forward.1} parent=1 // pred_check
      _
    $region27: #{clip_classifier_forward.1} parent=1 // pred_check_branch
      %54 = sbr.rel (0) target = $region29
    $region28: #{clip_classifier_forward.1} parent=1 // pred_region
      %55 = dma.done [#allocation6], 16
    $region29: #{clip_classifier_forward.1} parent=1 // pred_fallthru
      _
    %p57 = scmp.eq.s32.totalorder 0, 0
    // Predicated region
    $region30: #{clip_classifier_forward.1} parent=1 // pred_check
      %p58 = pneg %p57
    $region31: #{clip_classifier_forward.1} parent=1 // pred_check_branch
      %60 = sbr.rel (%p58) target = $region33
    $region32: #{clip_classifier_forward.1} parent=1 // pred_region
      %61 = vst [vmem:[#allocation2] sm:$0xff] 0.0
      %62 = vst [vmem:[#allocation2 + $0x8] sm:$0xff] 0.0
      %63 = vst [vmem:[#allocation2 + $0x10] sm:$0xff] 0.0
      %64 = vst [vmem:[#allocation2 + $0x18] sm:$0xff] 0.0
      %65 = vst [vmem:[#allocation2 + $0x20] sm:$0xff] 0.0
      %66 = vst [vmem:[#allocation2 + $0x28] sm:$0xff] 0.0
      %67 = vst [vmem:[#allocation2 + $0x30] sm:$0xff] 0.0
      %68 = vst [vmem:[#allocation2 + $0x38] sm:$0xff] 0.0
    $region33: #{clip_classifier_forward.1} parent=1 // pred_fallthru
      _
    %v69 = vld [vmem:[#allocation2] sm:$0xff]
    %v70 = vld [vmem:[#allocation2 + $0x8] sm:$0xff]
    %v71 = vld [vmem:[#allocation2 + $0x10] sm:$0xff]
    %v72 = vld [vmem:[#allocation2 + $0x18] sm:$0xff]
    %v73 = vld [vmem:[#allocation2 + $0x20] sm:$0xff]
    %v74 = vld [vmem:[#allocation2 + $0x28] sm:$0xff]
    %v75 = vld [vmem:[#allocation2 + $0x30] sm:$0xff]
    %v76 = vld [vmem:[#allocation2 + $0x38] sm:$0xff]
    %v77 = vld [vmem:[%s0] sm:$0xff]
    %v78 = vld [vmem:[%s0 + $0x8] sm:$0xff]
    %v79 = vld [vmem:[%s0 + $0x10] sm:$0xff]
    %v80 = vld [vmem:[#allocation3] sm:$0xff]
    %v81 = vld [vmem:[#allocation3 + $0x8] sm:$0xff]
    %v82 = vld [vmem:[#allocation3 + $0x10] sm:$0xff]
    %v83 = vld [vmem:[#allocation3 + $0x18] sm:$0xff]
    %v84 = vld [vmem:[#allocation3 + $0x20] sm:$0xff]
    %v85 = vld [vmem:[#allocation3 + $0x28] sm:$0xff]
    %v86 = vld [vmem:[#allocation3 + $0x30] sm:$0xff]
    %v87 = vld [vmem:[#allocation3 + $0x38] sm:$0xff]
    %v88 = vld [vmem:[#allocation3 + $0x40] sm:$0xff]
    %v89 = vld [vmem:[#allocation3 + $0x48] sm:$0xff]
    %v90 = vld [vmem:[#allocation3 + $0x50] sm:$0xff]
    %v91 = vld [vmem:[#allocation3 + $0x58] sm:$0xff]
    %v92 = vld [vmem:[#allocation3 + $0x60] sm:$0xff]
    %v93 = vld [vmem:[#allocation3 + $0x68] sm:$0xff]
    %v94 = vld [vmem:[#allocation3 + $0x70] sm:$0xff]
    %v95 = vld [vmem:[#allocation3 + $0x78] sm:$0xff]
    %v96 = vld [vmem:[#allocation3 + $0x80] sm:$0xff]
    %v97 = vld [vmem:[#allocation3 + $0x88] sm:$0xff]
    %v98 = vld [vmem:[#allocation3 + $0x90] sm:$0xff]
    %v99 = vld [vmem:[#allocation3 + $0x98] sm:$0xff]
    %v100 = vld [vmem:[#allocation3 + $0xa0] sm:$0xff]
    %v101 = vld [vmem:[#allocation3 + $0xa8] sm:$0xff]
    %v102 = vld [vmem:[#allocation3 + $0xb0] sm:$0xff]
    %v103 = vld [vmem:[#allocation3 + $0xb8] sm:$0xff]
    %v104 = vld [vmem:[#allocation3 + $0xc0] sm:$0xff]
    %v105 = vld [vmem:[#allocation3 + $0xc8] sm:$0xff]
    %v106 = vld [vmem:[#allocation3 + $0xd0] sm:$0xff]
    %v107 = vld [vmem:[#allocation3 + $0xd8] sm:$0xff]
    %v108 = vld [vmem:[#allocation3 + $0xe0] sm:$0xff]
    %v109 = vld [vmem:[#allocation3 + $0xe8] sm:$0xff]
    %v110 = vld [vmem:[#allocation3 + $0xf0] sm:$0xff]
    %v111 = vld [vmem:[#allocation3 + $0xf8] sm:$0xff]
    %v112 = vld [vmem:[#allocation3 + $0x100] sm:$0xff]
    %v113 = vld [vmem:[#allocation3 + $0x108] sm:$0xff]
    %v114 = vld [vmem:[#allocation3 + $0x110] sm:$0xff]
    %v115 = vld [vmem:[#allocation3 + $0x118] sm:$0xff]
    %v116 = vld [vmem:[#allocation3 + $0x120] sm:$0xff]
    %v117 = vld [vmem:[#allocation3 + $0x128] sm:$0xff]
    %v118 = vld [vmem:[#allocation3 + $0x130] sm:$0xff]
    %v119 = vld [vmem:[#allocation3 + $0x138] sm:$0xff]
    %v120 = vld [vmem:[#allocation3 + $0x140] sm:$0xff]
    %v121 = vld [vmem:[#allocation3 + $0x148] sm:$0xff]
    %v122 = vld [vmem:[#allocation3 + $0x150] sm:$0xff]
    %v123 = vld [vmem:[#allocation3 + $0x158] sm:$0xff]
    %v124 = vld [vmem:[#allocation3 + $0x160] sm:$0xff]
    %v125 = vld [vmem:[#allocation3 + $0x168] sm:$0xff]
    %v126 = vld [vmem:[#allocation3 + $0x170] sm:$0xff]
    %v127 = vld [vmem:[#allocation3 + $0x178] sm:$0xff]
    %v128 = vld [vmem:[#allocation3 + $0x180] sm:$0xff]
    %v129 = vld [vmem:[#allocation3 + $0x188] sm:$0xff]
    %v130 = vld [vmem:[#allocation3 + $0x190] sm:$0xff]
    %v131 = vld [vmem:[#allocation3 + $0x198] sm:$0xff]
    %v132 = vld [vmem:[#allocation3 + $0x1a0] sm:$0xff]
    %v133 = vld [vmem:[#allocation3 + $0x1a8] sm:$0xff]
    %v134 = vld [vmem:[#allocation3 + $0x1b0] sm:$0xff]
    %v135 = vld [vmem:[#allocation3 + $0x1b8] sm:$0xff]
    %v136 = vld [vmem:[#allocation3 + $0x1c0] sm:$0xff]
    %v137 = vld [vmem:[#allocation3 + $0x1c8] sm:$0xff]
    %v138 = vld [vmem:[#allocation3 + $0x1d0] sm:$0xff]
    %v139 = vld [vmem:[#allocation3 + $0x1d8] sm:$0xff]
    %v140 = vld [vmem:[#allocation3 + $0x1e0] sm:$0xff]
    %v141 = vld [vmem:[#allocation3 + $0x1e8] sm:$0xff]
    %v142 = vld [vmem:[#allocation3 + $0x1f0] sm:$0xff]
    %v143 = vld [vmem:[#allocation3 + $0x1f8] sm:$0xff]
    %v144 = vld [vmem:[#allocation3 + $0x200] sm:$0xff]
    %v145 = vld [vmem:[#allocation3 + $0x208] sm:$0xff]
    %v146 = vld [vmem:[#allocation3 + $0x210] sm:$0xff]
    %v147 = vld [vmem:[#allocation3 + $0x218] sm:$0xff]
    %v148 = vld [vmem:[#allocation3 + $0x220] sm:$0xff]
    %v149 = vld [vmem:[#allocation3 + $0x228] sm:$0xff]
    %v150 = vld [vmem:[#allocation3 + $0x230] sm:$0xff]
    %v151 = vld [vmem:[#allocation3 + $0x238] sm:$0xff]
    %v152 = vld [vmem:[#allocation3 + $0x240] sm:$0xff]
    %v153 = vld [vmem:[#allocation3 + $0x248] sm:$0xff]
    %v154 = vld [vmem:[#allocation3 + $0x250] sm:$0xff]
    %v155 = vld [vmem:[#allocation3 + $0x258] sm:$0xff]
    %v156 = vld [vmem:[#allocation3 + $0x260] sm:$0xff]
    %v157 = vld [vmem:[#allocation3 + $0x268] sm:$0xff]
    %v158 = vld [vmem:[#allocation3 + $0x270] sm:$0xff]
    %v159 = vld [vmem:[#allocation3 + $0x278] sm:$0xff]
    %v160 = vld [vmem:[#allocation3 + $0x280] sm:$0xff]
    %v161 = vld [vmem:[#allocation3 + $0x288] sm:$0xff]
    %v162 = vld [vmem:[#allocation3 + $0x290] sm:$0xff]
    %v163 = vld [vmem:[#allocation3 + $0x298] sm:$0xff]
    %v164 = vld [vmem:[#allocation3 + $0x2a0] sm:$0xff]
    %v165 = vld [vmem:[#allocation3 + $0x2a8] sm:$0xff]
    %v166 = vld [vmem:[#allocation3 + $0x2b0] sm:$0xff]
    %v167 = vld [vmem:[#allocation3 + $0x2b8] sm:$0xff]
    %v168 = vld [vmem:[#allocation3 + $0x2c0] sm:$0xff]
    %v169 = vld [vmem:[#allocation3 + $0x2c8] sm:$0xff]
    %v170 = vld [vmem:[#allocation3 + $0x2d0] sm:$0xff]
    %v171 = vld [vmem:[#allocation3 + $0x2d8] sm:$0xff]
    %v172 = vld [vmem:[#allocation3 + $0x2e0] sm:$0xff]
    %v173 = vld [vmem:[#allocation3 + $0x2e8] sm:$0xff]
    %v174 = vld [vmem:[#allocation3 + $0x2f0] sm:$0xff]
    %v175 = vld [vmem:[#allocation3 + $0x2f8] sm:$0xff]
    %v176 = vld [vmem:[#allocation3 + $0x300] sm:$0xff]
    %v177 = vld [vmem:[#allocation3 + $0x308] sm:$0xff]
    %v178 = vld [vmem:[#allocation3 + $0x310] sm:$0xff]
    %v179 = vld [vmem:[#allocation3 + $0x318] sm:$0xff]
    %v180 = vld [vmem:[#allocation3 + $0x320] sm:$0xff]
    %v181 = vld [vmem:[#allocation3 + $0x328] sm:$0xff]
    %v182 = vld [vmem:[#allocation3 + $0x330] sm:$0xff]
    %v183 = vld [vmem:[#allocation3 + $0x338] sm:$0xff]
    %v184 = vld [vmem:[#allocation3 + $0x340] sm:$0xff]
    %v185 = vld [vmem:[#allocation3 + $0x348] sm:$0xff]
    %v186 = vld [vmem:[#allocation3 + $0x350] sm:$0xff]
    %v187 = vld [vmem:[#allocation3 + $0x358] sm:$0xff]
    %v188 = vld [vmem:[#allocation3 + $0x360] sm:$0xff]
    %v189 = vld [vmem:[#allocation3 + $0x368] sm:$0xff]
    %v190 = vld [vmem:[#allocation3 + $0x370] sm:$0xff]
    %v191 = vld [vmem:[#allocation3 + $0x378] sm:$0xff]
    %v192 = vld [vmem:[#allocation3 + $0x380] sm:$0xff]
    %v193 = vld [vmem:[#allocation3 + $0x388] sm:$0xff]
    %v194 = vld [vmem:[#allocation3 + $0x390] sm:$0xff]
    %v195 = vld [vmem:[#allocation3 + $0x398] sm:$0xff]
    %v196 = vld [vmem:[#allocation3 + $0x3a0] sm:$0xff]
    %v197 = vld [vmem:[#allocation3 + $0x3a8] sm:$0xff]
    %v198 = vld [vmem:[#allocation3 + $0x3b0] sm:$0xff]
    %v199 = vld [vmem:[#allocation3 + $0x3b8] sm:$0xff]
    %v200 = vld [vmem:[#allocation3 + $0x3c0] sm:$0xff]
    %v201 = vld [vmem:[#allocation3 + $0x3c8] sm:$0xff]
    %v202 = vld [vmem:[#allocation3 + $0x3d0] sm:$0xff]
    %v203 = vld [vmem:[#allocation3 + $0x3d8] sm:$0xff]
    %v204 = vld [vmem:[#allocation3 + $0x3e0] sm:$0xff]
    %v205 = vld [vmem:[#allocation3 + $0x3e8] sm:$0xff]
    %v206 = vld [vmem:[#allocation3 + $0x3f0] sm:$0xff]
    %v207 = vld [vmem:[#allocation3 + $0x3f8] sm:$0xff]
    %v208 = vld [vmem:[#allocation3 + $0x400] sm:$0xff]
    %v209 = vld [vmem:[#allocation3 + $0x408] sm:$0xff]
    %v210 = vld [vmem:[#allocation3 + $0x410] sm:$0xff]
    %v211 = vld [vmem:[#allocation3 + $0x418] sm:$0xff]
    %v212 = vld [vmem:[#allocation3 + $0x420] sm:$0xff]
    %v213 = vld [vmem:[#allocation3 + $0x428] sm:$0xff]
    %v214 = vld [vmem:[#allocation3 + $0x430] sm:$0xff]
    %v215 = vld [vmem:[#allocation3 + $0x438] sm:$0xff]
    %v216 = vld [vmem:[#allocation3 + $0x440] sm:$0xff]
    %v217 = vld [vmem:[#allocation3 + $0x448] sm:$0xff]
    %v218 = vld [vmem:[#allocation3 + $0x450] sm:$0xff]
    %v219 = vld [vmem:[#allocation3 + $0x458] sm:$0xff]
    %v220 = vld [vmem:[#allocation3 + $0x460] sm:$0xff]
    %v221 = vld [vmem:[#allocation3 + $0x468] sm:$0xff]
    %v222 = vld [vmem:[#allocation3 + $0x470] sm:$0xff]
    %v223 = vld [vmem:[#allocation3 + $0x478] sm:$0xff]
    %v224 = vld [vmem:[#allocation3 + $0x480] sm:$0xff]
    %v225 = vld [vmem:[#allocation3 + $0x488] sm:$0xff]
    %v226 = vld [vmem:[#allocation3 + $0x490] sm:$0xff]
    %v227 = vld [vmem:[#allocation3 + $0x498] sm:$0xff]
    %v228 = vld [vmem:[#allocation3 + $0x4a0] sm:$0xff]
    %v229 = vld [vmem:[#allocation3 + $0x4a8] sm:$0xff]
    %v230 = vld [vmem:[#allocation3 + $0x4b0] sm:$0xff]
    %v231 = vld [vmem:[#allocation3 + $0x4b8] sm:$0xff]
    %v232 = vld [vmem:[#allocation3 + $0x4c0] sm:$0xff]
    %v233 = vld [vmem:[#allocation3 + $0x4c8] sm:$0xff]
    %v234 = vld [vmem:[#allocation3 + $0x4d0] sm:$0xff]
    %v235 = vld [vmem:[#allocation3 + $0x4d8] sm:$0xff]
    %v236 = vld [vmem:[#allocation3 + $0x4e0] sm:$0xff]
    %v237 = vld [vmem:[#allocation3 + $0x4e8] sm:$0xff]
    %v238 = vld [vmem:[#allocation3 + $0x4f0] sm:$0xff]
    %v239 = vld [vmem:[#allocation3 + $0x4f8] sm:$0xff]
    %v240 = vld [vmem:[#allocation3 + $0x500] sm:$0xff]
    %v241 = vld [vmem:[#allocation3 + $0x508] sm:$0xff]
    %v242 = vld [vmem:[#allocation3 + $0x510] sm:$0xff]
    %v243 = vld [vmem:[#allocation3 + $0x518] sm:$0xff]
    %v244 = vld [vmem:[#allocation3 + $0x520] sm:$0xff]
    %v245 = vld [vmem:[#allocation3 + $0x528] sm:$0xff]
    %v246 = vld [vmem:[#allocation3 + $0x530] sm:$0xff]
    %v247 = vld [vmem:[#allocation3 + $0x538] sm:$0xff]
    %v248 = vld [vmem:[#allocation3 + $0x540] sm:$0xff]
    %v249 = vld [vmem:[#allocation3 + $0x548] sm:$0xff]
    %v250 = vld [vmem:[#allocation3 + $0x550] sm:$0xff]
    %v251 = vld [vmem:[#allocation3 + $0x558] sm:$0xff]
    %v252 = vld [vmem:[#allocation3 + $0x560] sm:$0xff]
    %v253 = vld [vmem:[#allocation3 + $0x568] sm:$0xff]
    %v254 = vld [vmem:[#allocation3 + $0x570] sm:$0xff]
    %v255 = vld [vmem:[#allocation3 + $0x578] sm:$0xff]
    %v256 = vld [vmem:[#allocation3 + $0x580] sm:$0xff]
    %v257 = vld [vmem:[#allocation3 + $0x588] sm:$0xff]
    %v258 = vld [vmem:[#allocation3 + $0x590] sm:$0xff]
    %v259 = vld [vmem:[#allocation3 + $0x598] sm:$0xff]
    %v260 = vld [vmem:[#allocation3 + $0x5a0] sm:$0xff]
    %v261 = vld [vmem:[#allocation3 + $0x5a8] sm:$0xff]
    %v262 = vld [vmem:[#allocation3 + $0x5b0] sm:$0xff]
    %v263 = vld [vmem:[#allocation3 + $0x5b8] sm:$0xff]
    %v264 = vld [vmem:[#allocation3 + $0x5c0] sm:$0xff]
    %v265 = vld [vmem:[#allocation3 + $0x5c8] sm:$0xff]
    %v266 = vld [vmem:[#allocation3 + $0x5d0] sm:$0xff]
    %v267 = vld [vmem:[#allocation3 + $0x5d8] sm:$0xff]
    %v268 = vld [vmem:[#allocation3 + $0x5e0] sm:$0xff]
    %v269 = vld [vmem:[#allocation3 + $0x5e8] sm:$0xff]
    %v270 = vld [vmem:[#allocation3 + $0x5f0] sm:$0xff]
    %v271 = vld [vmem:[#allocation3 + $0x5f8] sm:$0xff]
    %v272 = vld [vmem:[#allocation3 + $0x600] sm:$0xff]
    %v273 = vld [vmem:[#allocation3 + $0x608] sm:$0xff]
    %v274 = vld [vmem:[#allocation3 + $0x610] sm:$0xff]
    %v275 = vld [vmem:[#allocation3 + $0x618] sm:$0xff]
    %v276 = vld [vmem:[#allocation3 + $0x620] sm:$0xff]
    %v277 = vld [vmem:[#allocation3 + $0x628] sm:$0xff]
    %v278 = vld [vmem:[#allocation3 + $0x630] sm:$0xff]
    %v279 = vld [vmem:[#allocation3 + $0x638] sm:$0xff]
    %v280 = vld [vmem:[#allocation3 + $0x640] sm:$0xff]
    %v281 = vld [vmem:[#allocation3 + $0x648] sm:$0xff]
    %v282 = vld [vmem:[#allocation3 + $0x650] sm:$0xff]
    %v283 = vld [vmem:[#allocation3 + $0x658] sm:$0xff]
    %v284 = vld [vmem:[#allocation3 + $0x660] sm:$0xff]
    %v285 = vld [vmem:[#allocation3 + $0x668] sm:$0xff]
    %v286 = vld [vmem:[#allocation3 + $0x670] sm:$0xff]
    %v287 = vld [vmem:[#allocation3 + $0x678] sm:$0xff]
    %v288 = vld [vmem:[#allocation3 + $0x680] sm:$0xff]
    %v289 = vld [vmem:[#allocation3 + $0x688] sm:$0xff]
    %v290 = vld [vmem:[#allocation3 + $0x690] sm:$0xff]
    %v291 = vld [vmem:[#allocation3 + $0x698] sm:$0xff]
    %v292 = vld [vmem:[#allocation3 + $0x6a0] sm:$0xff]
    %v293 = vld [vmem:[#allocation3 + $0x6a8] sm:$0xff]
    %v294 = vld [vmem:[#allocation3 + $0x6b0] sm:$0xff]
    %v295 = vld [vmem:[#allocation3 + $0x6b8] sm:$0xff]
    %v296 = vld [vmem:[#allocation3 + $0x6c0] sm:$0xff]
    %v297 = vld [vmem:[#allocation3 + $0x6c8] sm:$0xff]
    %v298 = vld [vmem:[#allocation3 + $0x6d0] sm:$0xff]
    %v299 = vld [vmem:[#allocation3 + $0x6d8] sm:$0xff]
    %v300 = vld [vmem:[#allocation3 + $0x6e0] sm:$0xff]
    %v301 = vld [vmem:[#allocation3 + $0x6e8] sm:$0xff]
    %v302 = vld [vmem:[#allocation3 + $0x6f0] sm:$0xff]
    %v303 = vld [vmem:[#allocation3 + $0x6f8] sm:$0xff]
    %v304 = vld [vmem:[#allocation3 + $0x700] sm:$0xff]
    %v305 = vld [vmem:[#allocation3 + $0x708] sm:$0xff]
    %v306 = vld [vmem:[#allocation3 + $0x710] sm:$0xff]
    %v307 = vld [vmem:[#allocation3 + $0x718] sm:$0xff]
    %v308 = vld [vmem:[#allocation3 + $0x720] sm:$0xff]
    %v309 = vld [vmem:[#allocation3 + $0x728] sm:$0xff]
    %v310 = vld [vmem:[#allocation3 + $0x730] sm:$0xff]
    %v311 = vld [vmem:[#allocation3 + $0x738] sm:$0xff]
    %v312 = vld [vmem:[#allocation3 + $0x740] sm:$0xff]
    %v313 = vld [vmem:[#allocation3 + $0x748] sm:$0xff]
    %v314 = vld [vmem:[#allocation3 + $0x750] sm:$0xff]
    %v315 = vld [vmem:[#allocation3 + $0x758] sm:$0xff]
    %v316 = vld [vmem:[#allocation3 + $0x760] sm:$0xff]
    %v317 = vld [vmem:[#allocation3 + $0x768] sm:$0xff]
    %v318 = vld [vmem:[#allocation3 + $0x770] sm:$0xff]
    %v319 = vld [vmem:[#allocation3 + $0x778] sm:$0xff]
    %v320 = vld [vmem:[#allocation3 + $0x780] sm:$0xff]
    %v321 = vld [vmem:[#allocation3 + $0x788] sm:$0xff]
    %v322 = vld [vmem:[#allocation3 + $0x790] sm:$0xff]
    %v323 = vld [vmem:[#allocation3 + $0x798] sm:$0xff]
    %v324 = vld [vmem:[#allocation3 + $0x7a0] sm:$0xff]
    %v325 = vld [vmem:[#allocation3 + $0x7a8] sm:$0xff]
    %v326 = vld [vmem:[#allocation3 + $0x7b0] sm:$0xff]
    %v327 = vld [vmem:[#allocation3 + $0x7b8] sm:$0xff]
    %v328 = vld [vmem:[#allocation3 + $0x7c0] sm:$0xff]
    %v329 = vld [vmem:[#allocation3 + $0x7c8] sm:$0xff]
    %v330 = vld [vmem:[#allocation3 + $0x7d0] sm:$0xff]
    %v331 = vld [vmem:[#allocation3 + $0x7d8] sm:$0xff]
    %v332 = vld [vmem:[#allocation3 + $0x7e0] sm:$0xff]
    %v333 = vld [vmem:[#allocation3 + $0x7e8] sm:$0xff]
    %v334 = vld [vmem:[#allocation3 + $0x7f0] sm:$0xff]
    %v335 = vld [vmem:[#allocation3 + $0x7f8] sm:$0xff]
    %v336 = vld [vmem:[#allocation3 + $0x800] sm:$0xff]
    %v337 = vld [vmem:[#allocation3 + $0x808] sm:$0xff]
    %v338 = vld [vmem:[#allocation3 + $0x810] sm:$0xff]
    %v339 = vld [vmem:[#allocation3 + $0x818] sm:$0xff]
    %v340 = vld [vmem:[#allocation3 + $0x820] sm:$0xff]
    %v341 = vld [vmem:[#allocation3 + $0x828] sm:$0xff]
    %v342 = vld [vmem:[#allocation3 + $0x830] sm:$0xff]
    %v343 = vld [vmem:[#allocation3 + $0x838] sm:$0xff]
    %v344 = vld [vmem:[#allocation3 + $0x840] sm:$0xff]
    %v345 = vld [vmem:[#allocation3 + $0x848] sm:$0xff]
    %v346 = vld [vmem:[#allocation3 + $0x850] sm:$0xff]
    %v347 = vld [vmem:[#allocation3 + $0x858] sm:$0xff]
    %v348 = vld [vmem:[#allocation3 + $0x860] sm:$0xff]
    %v349 = vld [vmem:[#allocation3 + $0x868] sm:$0xff]
    %v350 = vld [vmem:[#allocation3 + $0x870] sm:$0xff]
    %v351 = vld [vmem:[#allocation3 + $0x878] sm:$0xff]
    %v352 = vld [vmem:[#allocation3 + $0x880] sm:$0xff]
    %v353 = vld [vmem:[#allocation3 + $0x888] sm:$0xff]
    %v354 = vld [vmem:[#allocation3 + $0x890] sm:$0xff]
    %v355 = vld [vmem:[#allocation3 + $0x898] sm:$0xff]
    %v356 = vld [vmem:[#allocation3 + $0x8a0] sm:$0xff]
    %v357 = vld [vmem:[#allocation3 + $0x8a8] sm:$0xff]
    %v358 = vld [vmem:[#allocation3 + $0x8b0] sm:$0xff]
    %v359 = vld [vmem:[#allocation3 + $0x8b8] sm:$0xff]
    %v360 = vld [vmem:[#allocation3 + $0x8c0] sm:$0xff]
    %v361 = vld [vmem:[#allocation3 + $0x8c8] sm:$0xff]
    %v362 = vld [vmem:[#allocation3 + $0x8d0] sm:$0xff]
    %v363 = vld [vmem:[#allocation3 + $0x8d8] sm:$0xff]
    %v364 = vld [vmem:[#allocation3 + $0x8e0] sm:$0xff]
    %v365 = vld [vmem:[#allocation3 + $0x8e8] sm:$0xff]
    %v366 = vld [vmem:[#allocation3 + $0x8f0] sm:$0xff]
    %v367 = vld [vmem:[#allocation3 + $0x8f8] sm:$0xff]
    %v368 = vld [vmem:[#allocation3 + $0x900] sm:$0xff]
    %v369 = vld [vmem:[#allocation3 + $0x908] sm:$0xff]
    %v370 = vld [vmem:[#allocation3 + $0x910] sm:$0xff]
    %v371 = vld [vmem:[#allocation3 + $0x918] sm:$0xff]
    %v372 = vld [vmem:[#allocation3 + $0x920] sm:$0xff]
    %v373 = vld [vmem:[#allocation3 + $0x928] sm:$0xff]
    %v374 = vld [vmem:[#allocation3 + $0x930] sm:$0xff]
    %v375 = vld [vmem:[#allocation3 + $0x938] sm:$0xff]
    %v376 = vld [vmem:[#allocation3 + $0x940] sm:$0xff]
    %v377 = vld [vmem:[#allocation3 + $0x948] sm:$0xff]
    %v378 = vld [vmem:[#allocation3 + $0x950] sm:$0xff]
    %v379 = vld [vmem:[#allocation3 + $0x958] sm:$0xff]
    %v380 = vld [vmem:[#allocation3 + $0x960] sm:$0xff]
    %v381 = vld [vmem:[#allocation3 + $0x968] sm:$0xff]
    %v382 = vld [vmem:[#allocation3 + $0x970] sm:$0xff]
    %v383 = vld [vmem:[#allocation3 + $0x978] sm:$0xff]
    %v384 = vld [vmem:[#allocation3 + $0x980] sm:$0xff]
    %v385 = vld [vmem:[#allocation3 + $0x988] sm:$0xff]
    %v386 = vld [vmem:[#allocation3 + $0x990] sm:$0xff]
    %v387 = vld [vmem:[#allocation3 + $0x998] sm:$0xff]
    %v388 = vld [vmem:[#allocation3 + $0x9a0] sm:$0xff]
    %v389 = vld [vmem:[#allocation3 + $0x9a8] sm:$0xff]
    %v390 = vld [vmem:[#allocation3 + $0x9b0] sm:$0xff]
    %v391 = vld [vmem:[#allocation3 + $0x9b8] sm:$0xff]
    %v392 = vld [vmem:[#allocation3 + $0x9c0] sm:$0xff]
    %v393 = vld [vmem:[#allocation3 + $0x9c8] sm:$0xff]
    %v394 = vld [vmem:[#allocation3 + $0x9d0] sm:$0xff]
    %v395 = vld [vmem:[#allocation3 + $0x9d8] sm:$0xff]
    %v396 = vld [vmem:[#allocation3 + $0x9e0] sm:$0xff]
    %v397 = vld [vmem:[#allocation3 + $0x9e8] sm:$0xff]
    %v398 = vld [vmem:[#allocation3 + $0x9f0] sm:$0xff]
    %v399 = vld [vmem:[#allocation3 + $0x9f8] sm:$0xff]
    %v400 = vld [vmem:[#allocation3 + $0xa00] sm:$0xff]
    %v401 = vld [vmem:[#allocation3 + $0xa08] sm:$0xff]
    %v402 = vld [vmem:[#allocation3 + $0xa10] sm:$0xff]
    %v403 = vld [vmem:[#allocation3 + $0xa18] sm:$0xff]
    %v404 = vld [vmem:[#allocation3 + $0xa20] sm:$0xff]
    %v405 = vld [vmem:[#allocation3 + $0xa28] sm:$0xff]
    %v406 = vld [vmem:[#allocation3 + $0xa30] sm:$0xff]
    %v407 = vld [vmem:[#allocation3 + $0xa38] sm:$0xff]
    %v408 = vld [vmem:[#allocation3 + $0xa40] sm:$0xff]
    %v409 = vld [vmem:[#allocation3 + $0xa48] sm:$0xff]
    %v410 = vld [vmem:[#allocation3 + $0xa50] sm:$0xff]
    %v411 = vld [vmem:[#allocation3 + $0xa58] sm:$0xff]
    %v412 = vld [vmem:[#allocation3 + $0xa60] sm:$0xff]
    %v413 = vld [vmem:[#allocation3 + $0xa68] sm:$0xff]
    %v414 = vld [vmem:[#allocation3 + $0xa70] sm:$0xff]
    %v415 = vld [vmem:[#allocation3 + $0xa78] sm:$0xff]
    %v416 = vld [vmem:[#allocation3 + $0xa80] sm:$0xff]
    %v417 = vld [vmem:[#allocation3 + $0xa88] sm:$0xff]
    %v418 = vld [vmem:[#allocation3 + $0xa90] sm:$0xff]
    %v419 = vld [vmem:[#allocation3 + $0xa98] sm:$0xff]
    %v420 = vld [vmem:[#allocation3 + $0xaa0] sm:$0xff]
    %v421 = vld [vmem:[#allocation3 + $0xaa8] sm:$0xff]
    %v422 = vld [vmem:[#allocation3 + $0xab0] sm:$0xff]
    %v423 = vld [vmem:[#allocation3 + $0xab8] sm:$0xff]
    %v424 = vld [vmem:[#allocation3 + $0xac0] sm:$0xff]
    %v425 = vld [vmem:[#allocation3 + $0xac8] sm:$0xff]
    %v426 = vld [vmem:[#allocation3 + $0xad0] sm:$0xff]
    %v427 = vld [vmem:[#allocation3 + $0xad8] sm:$0xff]
    %v428 = vld [vmem:[#allocation3 + $0xae0] sm:$0xff]
    %v429 = vld [vmem:[#allocation3 + $0xae8] sm:$0xff]
    %v430 = vld [vmem:[#allocation3 + $0xaf0] sm:$0xff]
    %v431 = vld [vmem:[#allocation3 + $0xaf8] sm:$0xff]
    %v432 = vld [vmem:[#allocation3 + $0xb00] sm:$0xff]
    %v433 = vld [vmem:[#allocation3 + $0xb08] sm:$0xff]
    %v434 = vld [vmem:[#allocation3 + $0xb10] sm:$0xff]
    %v435 = vld [vmem:[#allocation3 + $0xb18] sm:$0xff]
    %v436 = vld [vmem:[#allocation3 + $0xb20] sm:$0xff]
    %v437 = vld [vmem:[#allocation3 + $0xb28] sm:$0xff]
    %v438 = vld [vmem:[#allocation3 + $0xb30] sm:$0xff]
    %v439 = vld [vmem:[#allocation3 + $0xb38] sm:$0xff]
    %v440 = vld [vmem:[#allocation3 + $0xb40] sm:$0xff]
    %v441 = vld [vmem:[#allocation3 + $0xb48] sm:$0xff]
    %v442 = vld [vmem:[#allocation3 + $0xb50] sm:$0xff]
    %v443 = vld [vmem:[#allocation3 + $0xb58] sm:$0xff]
    %v444 = vld [vmem:[#allocation3 + $0xb60] sm:$0xff]
    %v445 = vld [vmem:[#allocation3 + $0xb68] sm:$0xff]
    %v446 = vld [vmem:[#allocation3 + $0xb70] sm:$0xff]
    %v447 = vld [vmem:[#allocation3 + $0xb78] sm:$0xff]
    %v448 = vld [vmem:[#allocation3 + $0xb80] sm:$0xff]
    %v449 = vld [vmem:[#allocation3 + $0xb88] sm:$0xff]
    %v450 = vld [vmem:[#allocation3 + $0xb90] sm:$0xff]
    %v451 = vld [vmem:[#allocation3 + $0xb98] sm:$0xff]
    %v452 = vld [vmem:[#allocation3 + $0xba0] sm:$0xff]
    %v453 = vld [vmem:[#allocation3 + $0xba8] sm:$0xff]
    %v454 = vld [vmem:[#allocation3 + $0xbb0] sm:$0xff]
    %v455 = vld [vmem:[#allocation3 + $0xbb8] sm:$0xff]
    %v456 = vld [vmem:[#allocation3 + $0xbc0] sm:$0xff]
    %v457 = vld [vmem:[#allocation3 + $0xbc8] sm:$0xff]
    %v458 = vld [vmem:[#allocation3 + $0xbd0] sm:$0xff]
    %v459 = vld [vmem:[#allocation3 + $0xbd8] sm:$0xff]
    %v460 = vld [vmem:[#allocation3 + $0xbe0] sm:$0xff]
    %v461 = vld [vmem:[#allocation3 + $0xbe8] sm:$0xff]
    %v462 = vld [vmem:[#allocation3 + $0xbf0] sm:$0xff]
    %v463 = vld [vmem:[#allocation3 + $0xbf8] sm:$0xff]
    %v467 = vunpack.c.l.b16 %v77
    %v468 = vunpack.c.h.b16 %v77
    %v469 = vunpack.c.l.b16 %v78
    %v470 = vunpack.c.h.b16 %v78
    %v471 = vunpack.c.l.b16 %v79
    %v472 = vunpack.c.h.b16 %v79
    %v473 = vpack.c.b16 %v467, %v467
    %v474 = vpack.c.b16 %v468, %v468
    %v475 = vpack.c.b16 %v469, %v469
    %v476 = vpack.c.b16 %v470, %v470
    %v477 = vpack.c.b16 %v471, %v471
    %v478 = vpack.c.b16 %v472, %v472
    %v869 = vunpack.c.l.b16 %v80
    %v870 = vunpack.c.h.b16 %v80
    %v871 = vunpack.c.l.b16 %v81
    %v872 = vunpack.c.h.b16 %v81
    %v873 = vunpack.c.l.b16 %v82
    %v874 = vunpack.c.h.b16 %v82
    %v875 = vunpack.c.l.b16 %v83
    %v876 = vunpack.c.h.b16 %v83
    %v877 = vunpack.c.l.b16 %v84
    %v878 = vunpack.c.h.b16 %v84
    %v879 = vunpack.c.l.b16 %v85
    %v880 = vunpack.c.h.b16 %v85
    %v881 = vunpack.c.l.b16 %v86
    %v882 = vunpack.c.h.b16 %v86
    %v883 = vunpack.c.l.b16 %v87
    %v884 = vunpack.c.h.b16 %v87
    %v885 = vunpack.c.l.b16 %v88
    %v886 = vunpack.c.h.b16 %v88
    %v887 = vunpack.c.l.b16 %v89
    %v888 = vunpack.c.h.b16 %v89
    %v889 = vunpack.c.l.b16 %v90
    %v890 = vunpack.c.h.b16 %v90
    %v891 = vunpack.c.l.b16 %v91
    %v892 = vunpack.c.h.b16 %v91
    %v893 = vunpack.c.l.b16 %v92
    %v894 = vunpack.c.h.b16 %v92
    %v895 = vunpack.c.l.b16 %v93
    %v896 = vunpack.c.h.b16 %v93
    %v897 = vunpack.c.l.b16 %v94
    %v898 = vunpack.c.h.b16 %v94
    %v899 = vunpack.c.l.b16 %v95
    %v900 = vunpack.c.h.b16 %v95
    %v901 = vunpack.c.l.b16 %v96
    %v902 = vunpack.c.h.b16 %v96
    %v903 = vunpack.c.l.b16 %v97
    %v904 = vunpack.c.h.b16 %v97
    %v905 = vunpack.c.l.b16 %v98
    %v906 = vunpack.c.h.b16 %v98
    %v907 = vunpack.c.l.b16 %v99
    %v908 = vunpack.c.h.b16 %v99
    %v909 = vunpack.c.l.b16 %v100
    %v910 = vunpack.c.h.b16 %v100
    %v911 = vunpack.c.l.b16 %v101
    %v912 = vunpack.c.h.b16 %v101
    %v913 = vunpack.c.l.b16 %v102
    %v914 = vunpack.c.h.b16 %v102
    %v915 = vunpack.c.l.b16 %v103
    %v916 = vunpack.c.h.b16 %v103
    %v917 = vunpack.c.l.b16 %v104
    %v918 = vunpack.c.h.b16 %v104
    %v919 = vunpack.c.l.b16 %v105
    %v920 = vunpack.c.h.b16 %v105
    %v921 = vunpack.c.l.b16 %v106
    %v922 = vunpack.c.h.b16 %v106
    %v923 = vunpack.c.l.b16 %v107
    %v924 = vunpack.c.h.b16 %v107
    %v925 = vunpack.c.l.b16 %v108
    %v926 = vunpack.c.h.b16 %v108
    %v927 = vunpack.c.l.b16 %v109
    %v928 = vunpack.c.h.b16 %v109
    %v929 = vunpack.c.l.b16 %v110
    %v930 = vunpack.c.h.b16 %v110
    %v931 = vunpack.c.l.b16 %v111
    %v932 = vunpack.c.h.b16 %v111
    %v933 = vunpack.c.l.b16 %v112
    %v934 = vunpack.c.h.b16 %v112
    %v935 = vunpack.c.l.b16 %v113
    %v936 = vunpack.c.h.b16 %v113
    %v937 = vunpack.c.l.b16 %v114
    %v938 = vunpack.c.h.b16 %v114
    %v939 = vunpack.c.l.b16 %v115
    %v940 = vunpack.c.h.b16 %v115
    %v941 = vunpack.c.l.b16 %v116
    %v942 = vunpack.c.h.b16 %v116
    %v943 = vunpack.c.l.b16 %v117
    %v944 = vunpack.c.h.b16 %v117
    %v945 = vunpack.c.l.b16 %v118
    %v946 = vunpack.c.h.b16 %v118
    %v947 = vunpack.c.l.b16 %v119
    %v948 = vunpack.c.h.b16 %v119
    %v949 = vunpack.c.l.b16 %v120
    %v950 = vunpack.c.h.b16 %v120
    %v951 = vunpack.c.l.b16 %v121
    %v952 = vunpack.c.h.b16 %v121
    %v953 = vunpack.c.l.b16 %v122
    %v954 = vunpack.c.h.b16 %v122
    %v955 = vunpack.c.l.b16 %v123
    %v956 = vunpack.c.h.b16 %v123
    %v957 = vunpack.c.l.b16 %v124
    %v958 = vunpack.c.h.b16 %v124
    %v959 = vunpack.c.l.b16 %v125
    %v960 = vunpack.c.h.b16 %v125
    %v961 = vunpack.c.l.b16 %v126
    %v962 = vunpack.c.h.b16 %v126
    %v963 = vunpack.c.l.b16 %v127
    %v964 = vunpack.c.h.b16 %v127
    %v965 = vunpack.c.l.b16 %v128
    %v966 = vunpack.c.h.b16 %v128
    %v967 = vunpack.c.l.b16 %v129
    %v968 = vunpack.c.h.b16 %v129
    %v969 = vunpack.c.l.b16 %v130
    %v970 = vunpack.c.h.b16 %v130
    %v971 = vunpack.c.l.b16 %v131
    %v972 = vunpack.c.h.b16 %v131
    %v973 = vunpack.c.l.b16 %v132
    %v974 = vunpack.c.h.b16 %v132
    %v975 = vunpack.c.l.b16 %v133
    %v976 = vunpack.c.h.b16 %v133
    %v977 = vunpack.c.l.b16 %v134
    %v978 = vunpack.c.h.b16 %v134
    %v979 = vunpack.c.l.b16 %v135
    %v980 = vunpack.c.h.b16 %v135
    %v981 = vunpack.c.l.b16 %v136
    %v982 = vunpack.c.h.b16 %v136
    %v983 = vunpack.c.l.b16 %v137
    %v984 = vunpack.c.h.b16 %v137
    %v985 = vunpack.c.l.b16 %v138
    %v986 = vunpack.c.h.b16 %v138
    %v987 = vunpack.c.l.b16 %v139
    %v988 = vunpack.c.h.b16 %v139
    %v989 = vunpack.c.l.b16 %v140
    %v990 = vunpack.c.h.b16 %v140
    %v991 = vunpack.c.l.b16 %v141
    %v992 = vunpack.c.h.b16 %v141
    %v993 = vunpack.c.l.b16 %v142
    %v994 = vunpack.c.h.b16 %v142
    %v995 = vunpack.c.l.b16 %v143
    %v996 = vunpack.c.h.b16 %v143
    %v997 = vunpack.c.l.b16 %v144
    %v998 = vunpack.c.h.b16 %v144
    %v999 = vunpack.c.l.b16 %v145
    %v1000 = vunpack.c.h.b16 %v145
    %v1001 = vunpack.c.l.b16 %v146
    %v1002 = vunpack.c.h.b16 %v146
    %v1003 = vunpack.c.l.b16 %v147
    %v1004 = vunpack.c.h.b16 %v147
    %v1005 = vunpack.c.l.b16 %v148
    %v1006 = vunpack.c.h.b16 %v148
    %v1007 = vunpack.c.l.b16 %v149
    %v1008 = vunpack.c.h.b16 %v149
    %v1009 = vunpack.c.l.b16 %v150
    %v1010 = vunpack.c.h.b16 %v150
    %v1011 = vunpack.c.l.b16 %v151
    %v1012 = vunpack.c.h.b16 %v151
    %v1013 = vunpack.c.l.b16 %v152
    %v1014 = vunpack.c.h.b16 %v152
    %v1015 = vunpack.c.l.b16 %v153
    %v1016 = vunpack.c.h.b16 %v153
    %v1017 = vunpack.c.l.b16 %v154
    %v1018 = vunpack.c.h.b16 %v154
    %v1019 = vunpack.c.l.b16 %v155
    %v1020 = vunpack.c.h.b16 %v155
    %v1021 = vunpack.c.l.b16 %v156
    %v1022 = vunpack.c.h.b16 %v156
    %v1023 = vunpack.c.l.b16 %v157
    %v1024 = vunpack.c.h.b16 %v157
    %v1025 = vunpack.c.l.b16 %v158
    %v1026 = vunpack.c.h.b16 %v158
    %v1027 = vunpack.c.l.b16 %v159
    %v1028 = vunpack.c.h.b16 %v159
    %v1029 = vunpack.c.l.b16 %v160
    %v1030 = vunpack.c.h.b16 %v160
    %v1031 = vunpack.c.l.b16 %v161
    %v1032 = vunpack.c.h.b16 %v161
    %v1033 = vunpack.c.l.b16 %v162
    %v1034 = vunpack.c.h.b16 %v162
    %v1035 = vunpack.c.l.b16 %v163
    %v1036 = vunpack.c.h.b16 %v163
    %v1037 = vunpack.c.l.b16 %v164
    %v1038 = vunpack.c.h.b16 %v164
    %v1039 = vunpack.c.l.b16 %v165
    %v1040 = vunpack.c.h.b16 %v165
    %v1041 = vunpack.c.l.b16 %v166
    %v1042 = vunpack.c.h.b16 %v166
    %v1043 = vunpack.c.l.b16 %v167
    %v1044 = vunpack.c.h.b16 %v167
    %v1045 = vunpack.c.l.b16 %v168
    %v1046 = vunpack.c.h.b16 %v168
    %v1047 = vunpack.c.l.b16 %v169
    %v1048 = vunpack.c.h.b16 %v169
    %v1049 = vunpack.c.l.b16 %v170
    %v1050 = vunpack.c.h.b16 %v170
    %v1051 = vunpack.c.l.b16 %v171
    %v1052 = vunpack.c.h.b16 %v171
    %v1053 = vunpack.c.l.b16 %v172
    %v1054 = vunpack.c.h.b16 %v172
    %v1055 = vunpack.c.l.b16 %v173
    %v1056 = vunpack.c.h.b16 %v173
    %v1057 = vunpack.c.l.b16 %v174
    %v1058 = vunpack.c.h.b16 %v174
    %v1059 = vunpack.c.l.b16 %v175
    %v1060 = vunpack.c.h.b16 %v175
    %v1061 = vunpack.c.l.b16 %v176
    %v1062 = vunpack.c.h.b16 %v176
    %v1063 = vunpack.c.l.b16 %v177
    %v1064 = vunpack.c.h.b16 %v177
    %v1065 = vunpack.c.l.b16 %v178
    %v1066 = vunpack.c.h.b16 %v178
    %v1067 = vunpack.c.l.b16 %v179
    %v1068 = vunpack.c.h.b16 %v179
    %v1069 = vunpack.c.l.b16 %v180
    %v1070 = vunpack.c.h.b16 %v180
    %v1071 = vunpack.c.l.b16 %v181
    %v1072 = vunpack.c.h.b16 %v181
    %v1073 = vunpack.c.l.b16 %v182
    %v1074 = vunpack.c.h.b16 %v182
    %v1075 = vunpack.c.l.b16 %v183
    %v1076 = vunpack.c.h.b16 %v183
    %v1077 = vunpack.c.l.b16 %v184
    %v1078 = vunpack.c.h.b16 %v184
    %v1079 = vunpack.c.l.b16 %v185
    %v1080 = vunpack.c.h.b16 %v185
    %v1081 = vunpack.c.l.b16 %v186
    %v1082 = vunpack.c.h.b16 %v186
    %v1083 = vunpack.c.l.b16 %v187
    %v1084 = vunpack.c.h.b16 %v187
    %v1085 = vunpack.c.l.b16 %v188
    %v1086 = vunpack.c.h.b16 %v188
    %v1087 = vunpack.c.l.b16 %v189
    %v1088 = vunpack.c.h.b16 %v189
    %v1089 = vunpack.c.l.b16 %v190
    %v1090 = vunpack.c.h.b16 %v190
    %v1091 = vunpack.c.l.b16 %v191
    %v1092 = vunpack.c.h.b16 %v191
    %v1093 = vunpack.c.l.b16 %v192
    %v1094 = vunpack.c.h.b16 %v192
    %v1095 = vunpack.c.l.b16 %v193
    %v1096 = vunpack.c.h.b16 %v193
    %v1097 = vunpack.c.l.b16 %v194
    %v1098 = vunpack.c.h.b16 %v194
    %v1099 = vunpack.c.l.b16 %v195
    %v1100 = vunpack.c.h.b16 %v195
    %v1101 = vunpack.c.l.b16 %v196
    %v1102 = vunpack.c.h.b16 %v196
    %v1103 = vunpack.c.l.b16 %v197
    %v1104 = vunpack.c.h.b16 %v197
    %v1105 = vunpack.c.l.b16 %v198
    %v1106 = vunpack.c.h.b16 %v198
    %v1107 = vunpack.c.l.b16 %v199
    %v1108 = vunpack.c.h.b16 %v199
    %v1109 = vunpack.c.l.b16 %v200
    %v1110 = vunpack.c.h.b16 %v200
    %v1111 = vunpack.c.l.b16 %v201
    %v1112 = vunpack.c.h.b16 %v201
    %v1113 = vunpack.c.l.b16 %v202
    %v1114 = vunpack.c.h.b16 %v202
    %v1115 = vunpack.c.l.b16 %v203
    %v1116 = vunpack.c.h.b16 %v203
    %v1117 = vunpack.c.l.b16 %v204
    %v1118 = vunpack.c.h.b16 %v204
    %v1119 = vunpack.c.l.b16 %v205
    %v1120 = vunpack.c.h.b16 %v205
    %v1121 = vunpack.c.l.b16 %v206
    %v1122 = vunpack.c.h.b16 %v206
    %v1123 = vunpack.c.l.b16 %v207
    %v1124 = vunpack.c.h.b16 %v207
    %v1125 = vunpack.c.l.b16 %v208
    %v1126 = vunpack.c.h.b16 %v208
    %v1127 = vunpack.c.l.b16 %v209
    %v1128 = vunpack.c.h.b16 %v209
    %v1129 = vunpack.c.l.b16 %v210
    %v1130 = vunpack.c.h.b16 %v210
    %v1131 = vunpack.c.l.b16 %v211
    %v1132 = vunpack.c.h.b16 %v211
    %v1133 = vunpack.c.l.b16 %v212
    %v1134 = vunpack.c.h.b16 %v212
    %v1135 = vunpack.c.l.b16 %v213
    %v1136 = vunpack.c.h.b16 %v213
    %v1137 = vunpack.c.l.b16 %v214
    %v1138 = vunpack.c.h.b16 %v214
    %v1139 = vunpack.c.l.b16 %v215
    %v1140 = vunpack.c.h.b16 %v215
    %v1141 = vunpack.c.l.b16 %v216
    %v1142 = vunpack.c.h.b16 %v216
    %v1143 = vunpack.c.l.b16 %v217
    %v1144 = vunpack.c.h.b16 %v217
    %v1145 = vunpack.c.l.b16 %v218
    %v1146 = vunpack.c.h.b16 %v218
    %v1147 = vunpack.c.l.b16 %v219
    %v1148 = vunpack.c.h.b16 %v219
    %v1149 = vunpack.c.l.b16 %v220
    %v1150 = vunpack.c.h.b16 %v220
    %v1151 = vunpack.c.l.b16 %v221
    %v1152 = vunpack.c.h.b16 %v221
    %v1153 = vunpack.c.l.b16 %v222
    %v1154 = vunpack.c.h.b16 %v222
    %v1155 = vunpack.c.l.b16 %v223
    %v1156 = vunpack.c.h.b16 %v223
    %v1157 = vunpack.c.l.b16 %v224
    %v1158 = vunpack.c.h.b16 %v224
    %v1159 = vunpack.c.l.b16 %v225
    %v1160 = vunpack.c.h.b16 %v225
    %v1161 = vunpack.c.l.b16 %v226
    %v1162 = vunpack.c.h.b16 %v226
    %v1163 = vunpack.c.l.b16 %v227
    %v1164 = vunpack.c.h.b16 %v227
    %v1165 = vunpack.c.l.b16 %v228
    %v1166 = vunpack.c.h.b16 %v228
    %v1167 = vunpack.c.l.b16 %v229
    %v1168 = vunpack.c.h.b16 %v229
    %v1169 = vunpack.c.l.b16 %v230
    %v1170 = vunpack.c.h.b16 %v230
    %v1171 = vunpack.c.l.b16 %v231
    %v1172 = vunpack.c.h.b16 %v231
    %v1173 = vunpack.c.l.b16 %v232
    %v1174 = vunpack.c.h.b16 %v232
    %v1175 = vunpack.c.l.b16 %v233
    %v1176 = vunpack.c.h.b16 %v233
    %v1177 = vunpack.c.l.b16 %v234
    %v1178 = vunpack.c.h.b16 %v234
    %v1179 = vunpack.c.l.b16 %v235
    %v1180 = vunpack.c.h.b16 %v235
    %v1181 = vunpack.c.l.b16 %v236
    %v1182 = vunpack.c.h.b16 %v236
    %v1183 = vunpack.c.l.b16 %v237
    %v1184 = vunpack.c.h.b16 %v237
    %v1185 = vunpack.c.l.b16 %v238
    %v1186 = vunpack.c.h.b16 %v238
    %v1187 = vunpack.c.l.b16 %v239
    %v1188 = vunpack.c.h.b16 %v239
    %v1189 = vunpack.c.l.b16 %v240
    %v1190 = vunpack.c.h.b16 %v240
    %v1191 = vunpack.c.l.b16 %v241
    %v1192 = vunpack.c.h.b16 %v241
    %v1193 = vunpack.c.l.b16 %v242
    %v1194 = vunpack.c.h.b16 %v242
    %v1195 = vunpack.c.l.b16 %v243
    %v1196 = vunpack.c.h.b16 %v243
    %v1197 = vunpack.c.l.b16 %v244
    %v1198 = vunpack.c.h.b16 %v244
    %v1199 = vunpack.c.l.b16 %v245
    %v1200 = vunpack.c.h.b16 %v245
    %v1201 = vunpack.c.l.b16 %v246
    %v1202 = vunpack.c.h.b16 %v246
    %v1203 = vunpack.c.l.b16 %v247
    %v1204 = vunpack.c.h.b16 %v247
    %v1205 = vunpack.c.l.b16 %v248
    %v1206 = vunpack.c.h.b16 %v248
    %v1207 = vunpack.c.l.b16 %v249
    %v1208 = vunpack.c.h.b16 %v249
    %v1209 = vunpack.c.l.b16 %v250
    %v1210 = vunpack.c.h.b16 %v250
    %v1211 = vunpack.c.l.b16 %v251
    %v1212 = vunpack.c.h.b16 %v251
    %v1213 = vunpack.c.l.b16 %v252
    %v1214 = vunpack.c.h.b16 %v252
    %v1215 = vunpack.c.l.b16 %v253
    %v1216 = vunpack.c.h.b16 %v253
    %v1217 = vunpack.c.l.b16 %v254
    %v1218 = vunpack.c.h.b16 %v254
    %v1219 = vunpack.c.l.b16 %v255
    %v1220 = vunpack.c.h.b16 %v255
    %v1221 = vunpack.c.l.b16 %v256
    %v1222 = vunpack.c.h.b16 %v256
    %v1223 = vunpack.c.l.b16 %v257
    %v1224 = vunpack.c.h.b16 %v257
    %v1225 = vunpack.c.l.b16 %v258
    %v1226 = vunpack.c.h.b16 %v258
    %v1227 = vunpack.c.l.b16 %v259
    %v1228 = vunpack.c.h.b16 %v259
    %v1229 = vunpack.c.l.b16 %v260
    %v1230 = vunpack.c.h.b16 %v260
    %v1231 = vunpack.c.l.b16 %v261
    %v1232 = vunpack.c.h.b16 %v261
    %v1233 = vunpack.c.l.b16 %v262
    %v1234 = vunpack.c.h.b16 %v262
    %v1235 = vunpack.c.l.b16 %v263
    %v1236 = vunpack.c.h.b16 %v263
    %v1237 = vunpack.c.l.b16 %v264
    %v1238 = vunpack.c.h.b16 %v264
    %v1239 = vunpack.c.l.b16 %v265
    %v1240 = vunpack.c.h.b16 %v265
    %v1241 = vunpack.c.l.b16 %v266
    %v1242 = vunpack.c.h.b16 %v266
    %v1243 = vunpack.c.l.b16 %v267
    %v1244 = vunpack.c.h.b16 %v267
    %v1245 = vunpack.c.l.b16 %v268
    %v1246 = vunpack.c.h.b16 %v268
    %v1247 = vunpack.c.l.b16 %v269
    %v1248 = vunpack.c.h.b16 %v269
    %v1249 = vunpack.c.l.b16 %v270
    %v1250 = vunpack.c.h.b16 %v270
    %v1251 = vunpack.c.l.b16 %v271
    %v1252 = vunpack.c.h.b16 %v271
    %v1253 = vunpack.c.l.b16 %v272
    %v1254 = vunpack.c.h.b16 %v272
    %v1255 = vunpack.c.l.b16 %v273
    %v1256 = vunpack.c.h.b16 %v273
    %v1257 = vunpack.c.l.b16 %v274
    %v1258 = vunpack.c.h.b16 %v274
    %v1259 = vunpack.c.l.b16 %v275
    %v1260 = vunpack.c.h.b16 %v275
    %v1261 = vunpack.c.l.b16 %v276
    %v1262 = vunpack.c.h.b16 %v276
    %v1263 = vunpack.c.l.b16 %v277
    %v1264 = vunpack.c.h.b16 %v277
    %v1265 = vunpack.c.l.b16 %v278
    %v1266 = vunpack.c.h.b16 %v278
    %v1267 = vunpack.c.l.b16 %v279
    %v1268 = vunpack.c.h.b16 %v279
    %v1269 = vunpack.c.l.b16 %v280
    %v1270 = vunpack.c.h.b16 %v280
    %v1271 = vunpack.c.l.b16 %v281
    %v1272 = vunpack.c.h.b16 %v281
    %v1273 = vunpack.c.l.b16 %v282
    %v1274 = vunpack.c.h.b16 %v282
    %v1275 = vunpack.c.l.b16 %v283
    %v1276 = vunpack.c.h.b16 %v283
    %v1277 = vunpack.c.l.b16 %v284
    %v1278 = vunpack.c.h.b16 %v284
    %v1279 = vunpack.c.l.b16 %v285
    %v1280 = vunpack.c.h.b16 %v285
    %v1281 = vunpack.c.l.b16 %v286
    %v1282 = vunpack.c.h.b16 %v286
    %v1283 = vunpack.c.l.b16 %v287
    %v1284 = vunpack.c.h.b16 %v287
    %v1285 = vunpack.c.l.b16 %v288
    %v1286 = vunpack.c.h.b16 %v288
    %v1287 = vunpack.c.l.b16 %v289
    %v1288 = vunpack.c.h.b16 %v289
    %v1289 = vunpack.c.l.b16 %v290
    %v1290 = vunpack.c.h.b16 %v290
    %v1291 = vunpack.c.l.b16 %v291
    %v1292 = vunpack.c.h.b16 %v291
    %v1293 = vunpack.c.l.b16 %v292
    %v1294 = vunpack.c.h.b16 %v292
    %v1295 = vunpack.c.l.b16 %v293
    %v1296 = vunpack.c.h.b16 %v293
    %v1297 = vunpack.c.l.b16 %v294
    %v1298 = vunpack.c.h.b16 %v294
    %v1299 = vunpack.c.l.b16 %v295
    %v1300 = vunpack.c.h.b16 %v295
    %v1301 = vunpack.c.l.b16 %v296
    %v1302 = vunpack.c.h.b16 %v296
    %v1303 = vunpack.c.l.b16 %v297
    %v1304 = vunpack.c.h.b16 %v297
    %v1305 = vunpack.c.l.b16 %v298
    %v1306 = vunpack.c.h.b16 %v298
    %v1307 = vunpack.c.l.b16 %v299
    %v1308 = vunpack.c.h.b16 %v299
    %v1309 = vunpack.c.l.b16 %v300
    %v1310 = vunpack.c.h.b16 %v300
    %v1311 = vunpack.c.l.b16 %v301
    %v1312 = vunpack.c.h.b16 %v301
    %v1313 = vunpack.c.l.b16 %v302
    %v1314 = vunpack.c.h.b16 %v302
    %v1315 = vunpack.c.l.b16 %v303
    %v1316 = vunpack.c.h.b16 %v303
    %v1317 = vunpack.c.l.b16 %v304
    %v1318 = vunpack.c.h.b16 %v304
    %v1319 = vunpack.c.l.b16 %v305
    %v1320 = vunpack.c.h.b16 %v305
    %v1321 = vunpack.c.l.b16 %v306
    %v1322 = vunpack.c.h.b16 %v306
    %v1323 = vunpack.c.l.b16 %v307
    %v1324 = vunpack.c.h.b16 %v307
    %v1325 = vunpack.c.l.b16 %v308
    %v1326 = vunpack.c.h.b16 %v308
    %v1327 = vunpack.c.l.b16 %v309
    %v1328 = vunpack.c.h.b16 %v309
    %v1329 = vunpack.c.l.b16 %v310
    %v1330 = vunpack.c.h.b16 %v310
    %v1331 = vunpack.c.l.b16 %v311
    %v1332 = vunpack.c.h.b16 %v311
    %v1333 = vunpack.c.l.b16 %v312
    %v1334 = vunpack.c.h.b16 %v312
    %v1335 = vunpack.c.l.b16 %v313
    %v1336 = vunpack.c.h.b16 %v313
    %v1337 = vunpack.c.l.b16 %v314
    %v1338 = vunpack.c.h.b16 %v314
    %v1339 = vunpack.c.l.b16 %v315
    %v1340 = vunpack.c.h.b16 %v315
    %v1341 = vunpack.c.l.b16 %v316
    %v1342 = vunpack.c.h.b16 %v316
    %v1343 = vunpack.c.l.b16 %v317
    %v1344 = vunpack.c.h.b16 %v317
    %v1345 = vunpack.c.l.b16 %v318
    %v1346 = vunpack.c.h.b16 %v318
    %v1347 = vunpack.c.l.b16 %v319
    %v1348 = vunpack.c.h.b16 %v319
    %v1349 = vunpack.c.l.b16 %v320
    %v1350 = vunpack.c.h.b16 %v320
    %v1351 = vunpack.c.l.b16 %v321
    %v1352 = vunpack.c.h.b16 %v321
    %v1353 = vunpack.c.l.b16 %v322
    %v1354 = vunpack.c.h.b16 %v322
    %v1355 = vunpack.c.l.b16 %v323
    %v1356 = vunpack.c.h.b16 %v323
    %v1357 = vunpack.c.l.b16 %v324
    %v1358 = vunpack.c.h.b16 %v324
    %v1359 = vunpack.c.l.b16 %v325
    %v1360 = vunpack.c.h.b16 %v325
    %v1361 = vunpack.c.l.b16 %v326
    %v1362 = vunpack.c.h.b16 %v326
    %v1363 = vunpack.c.l.b16 %v327
    %v1364 = vunpack.c.h.b16 %v327
    %v1365 = vunpack.c.l.b16 %v328
    %v1366 = vunpack.c.h.b16 %v328
    %v1367 = vunpack.c.l.b16 %v329
    %v1368 = vunpack.c.h.b16 %v329
    %v1369 = vunpack.c.l.b16 %v330
    %v1370 = vunpack.c.h.b16 %v330
    %v1371 = vunpack.c.l.b16 %v331
    %v1372 = vunpack.c.h.b16 %v331
    %v1373 = vunpack.c.l.b16 %v332
    %v1374 = vunpack.c.h.b16 %v332
    %v1375 = vunpack.c.l.b16 %v333
    %v1376 = vunpack.c.h.b16 %v333
    %v1377 = vunpack.c.l.b16 %v334
    %v1378 = vunpack.c.h.b16 %v334
    %v1379 = vunpack.c.l.b16 %v335
    %v1380 = vunpack.c.h.b16 %v335
    %v1381 = vunpack.c.l.b16 %v336
    %v1382 = vunpack.c.h.b16 %v336
    %v1383 = vunpack.c.l.b16 %v337
    %v1384 = vunpack.c.h.b16 %v337
    %v1385 = vunpack.c.l.b16 %v338
    %v1386 = vunpack.c.h.b16 %v338
    %v1387 = vunpack.c.l.b16 %v339
    %v1388 = vunpack.c.h.b16 %v339
    %v1389 = vunpack.c.l.b16 %v340
    %v1390 = vunpack.c.h.b16 %v340
    %v1391 = vunpack.c.l.b16 %v341
    %v1392 = vunpack.c.h.b16 %v341
    %v1393 = vunpack.c.l.b16 %v342
    %v1394 = vunpack.c.h.b16 %v342
    %v1395 = vunpack.c.l.b16 %v343
    %v1396 = vunpack.c.h.b16 %v343
    %v1397 = vunpack.c.l.b16 %v344
    %v1398 = vunpack.c.h.b16 %v344
    %v1399 = vunpack.c.l.b16 %v345
    %v1400 = vunpack.c.h.b16 %v345
    %v1401 = vunpack.c.l.b16 %v346
    %v1402 = vunpack.c.h.b16 %v346
    %v1403 = vunpack.c.l.b16 %v347
    %v1404 = vunpack.c.h.b16 %v347
    %v1405 = vunpack.c.l.b16 %v348
    %v1406 = vunpack.c.h.b16 %v348
    %v1407 = vunpack.c.l.b16 %v349
    %v1408 = vunpack.c.h.b16 %v349
    %v1409 = vunpack.c.l.b16 %v350
    %v1410 = vunpack.c.h.b16 %v350
    %v1411 = vunpack.c.l.b16 %v351
    %v1412 = vunpack.c.h.b16 %v351
    %v1413 = vunpack.c.l.b16 %v352
    %v1414 = vunpack.c.h.b16 %v352
    %v1415 = vunpack.c.l.b16 %v353
    %v1416 = vunpack.c.h.b16 %v353
    %v1417 = vunpack.c.l.b16 %v354
    %v1418 = vunpack.c.h.b16 %v354
    %v1419 = vunpack.c.l.b16 %v355
    %v1420 = vunpack.c.h.b16 %v355
    %v1421 = vunpack.c.l.b16 %v356
    %v1422 = vunpack.c.h.b16 %v356
    %v1423 = vunpack.c.l.b16 %v357
    %v1424 = vunpack.c.h.b16 %v357
    %v1425 = vunpack.c.l.b16 %v358
    %v1426 = vunpack.c.h.b16 %v358
    %v1427 = vunpack.c.l.b16 %v359
    %v1428 = vunpack.c.h.b16 %v359
    %v1429 = vunpack.c.l.b16 %v360
    %v1430 = vunpack.c.h.b16 %v360
    %v1431 = vunpack.c.l.b16 %v361
    %v1432 = vunpack.c.h.b16 %v361
    %v1433 = vunpack.c.l.b16 %v362
    %v1434 = vunpack.c.h.b16 %v362
    %v1435 = vunpack.c.l.b16 %v363
    %v1436 = vunpack.c.h.b16 %v363
    %v1437 = vunpack.c.l.b16 %v364
    %v1438 = vunpack.c.h.b16 %v364
    %v1439 = vunpack.c.l.b16 %v365
    %v1440 = vunpack.c.h.b16 %v365
    %v1441 = vunpack.c.l.b16 %v366
    %v1442 = vunpack.c.h.b16 %v366
    %v1443 = vunpack.c.l.b16 %v367
    %v1444 = vunpack.c.h.b16 %v367
    %v1445 = vunpack.c.l.b16 %v368
    %v1446 = vunpack.c.h.b16 %v368
    %v1447 = vunpack.c.l.b16 %v369
    %v1448 = vunpack.c.h.b16 %v369
    %v1449 = vunpack.c.l.b16 %v370
    %v1450 = vunpack.c.h.b16 %v370
    %v1451 = vunpack.c.l.b16 %v371
    %v1452 = vunpack.c.h.b16 %v371
    %v1453 = vunpack.c.l.b16 %v372
    %v1454 = vunpack.c.h.b16 %v372
    %v1455 = vunpack.c.l.b16 %v373
    %v1456 = vunpack.c.h.b16 %v373
    %v1457 = vunpack.c.l.b16 %v374
    %v1458 = vunpack.c.h.b16 %v374
    %v1459 = vunpack.c.l.b16 %v375
    %v1460 = vunpack.c.h.b16 %v375
    %v1461 = vunpack.c.l.b16 %v376
    %v1462 = vunpack.c.h.b16 %v376
    %v1463 = vunpack.c.l.b16 %v377
    %v1464 = vunpack.c.h.b16 %v377
    %v1465 = vunpack.c.l.b16 %v378
    %v1466 = vunpack.c.h.b16 %v378
    %v1467 = vunpack.c.l.b16 %v379
    %v1468 = vunpack.c.h.b16 %v379
    %v1469 = vunpack.c.l.b16 %v380
    %v1470 = vunpack.c.h.b16 %v380
    %v1471 = vunpack.c.l.b16 %v381
    %v1472 = vunpack.c.h.b16 %v381
    %v1473 = vunpack.c.l.b16 %v382
    %v1474 = vunpack.c.h.b16 %v382
    %v1475 = vunpack.c.l.b16 %v383
    %v1476 = vunpack.c.h.b16 %v383
    %v1477 = vunpack.c.l.b16 %v384
    %v1478 = vunpack.c.h.b16 %v384
    %v1479 = vunpack.c.l.b16 %v385
    %v1480 = vunpack.c.h.b16 %v385
    %v1481 = vunpack.c.l.b16 %v386
    %v1482 = vunpack.c.h.b16 %v386
    %v1483 = vunpack.c.l.b16 %v387
    %v1484 = vunpack.c.h.b16 %v387
    %v1485 = vunpack.c.l.b16 %v388
    %v1486 = vunpack.c.h.b16 %v388
    %v1487 = vunpack.c.l.b16 %v389
    %v1488 = vunpack.c.h.b16 %v389
    %v1489 = vunpack.c.l.b16 %v390
    %v1490 = vunpack.c.h.b16 %v390
    %v1491 = vunpack.c.l.b16 %v391
    %v1492 = vunpack.c.h.b16 %v391
    %v1493 = vunpack.c.l.b16 %v392
    %v1494 = vunpack.c.h.b16 %v392
    %v1495 = vunpack.c.l.b16 %v393
    %v1496 = vunpack.c.h.b16 %v393
    %v1497 = vunpack.c.l.b16 %v394
    %v1498 = vunpack.c.h.b16 %v394
    %v1499 = vunpack.c.l.b16 %v395
    %v1500 = vunpack.c.h.b16 %v395
    %v1501 = vunpack.c.l.b16 %v396
    %v1502 = vunpack.c.h.b16 %v396
    %v1503 = vunpack.c.l.b16 %v397
    %v1504 = vunpack.c.h.b16 %v397
    %v1505 = vunpack.c.l.b16 %v398
    %v1506 = vunpack.c.h.b16 %v398
    %v1507 = vunpack.c.l.b16 %v399
    %v1508 = vunpack.c.h.b16 %v399
    %v1509 = vunpack.c.l.b16 %v400
    %v1510 = vunpack.c.h.b16 %v400
    %v1511 = vunpack.c.l.b16 %v401
    %v1512 = vunpack.c.h.b16 %v401
    %v1513 = vunpack.c.l.b16 %v402
    %v1514 = vunpack.c.h.b16 %v402
    %v1515 = vunpack.c.l.b16 %v403
    %v1516 = vunpack.c.h.b16 %v403
    %v1517 = vunpack.c.l.b16 %v404
    %v1518 = vunpack.c.h.b16 %v404
    %v1519 = vunpack.c.l.b16 %v405
    %v1520 = vunpack.c.h.b16 %v405
    %v1521 = vunpack.c.l.b16 %v406
    %v1522 = vunpack.c.h.b16 %v406
    %v1523 = vunpack.c.l.b16 %v407
    %v1524 = vunpack.c.h.b16 %v407
    %v1525 = vunpack.c.l.b16 %v408
    %v1526 = vunpack.c.h.b16 %v408
    %v1527 = vunpack.c.l.b16 %v409
    %v1528 = vunpack.c.h.b16 %v409
    %v1529 = vunpack.c.l.b16 %v410
    %v1530 = vunpack.c.h.b16 %v410
    %v1531 = vunpack.c.l.b16 %v411
    %v1532 = vunpack.c.h.b16 %v411
    %v1533 = vunpack.c.l.b16 %v412
    %v1534 = vunpack.c.h.b16 %v412
    %v1535 = vunpack.c.l.b16 %v413
    %v1536 = vunpack.c.h.b16 %v413
    %v1537 = vunpack.c.l.b16 %v414
    %v1538 = vunpack.c.h.b16 %v414
    %v1539 = vunpack.c.l.b16 %v415
    %v1540 = vunpack.c.h.b16 %v415
    %v1541 = vunpack.c.l.b16 %v416
    %v1542 = vunpack.c.h.b16 %v416
    %v1543 = vunpack.c.l.b16 %v417
    %v1544 = vunpack.c.h.b16 %v417
    %v1545 = vunpack.c.l.b16 %v418
    %v1546 = vunpack.c.h.b16 %v418
    %v1547 = vunpack.c.l.b16 %v419
    %v1548 = vunpack.c.h.b16 %v419
    %v1549 = vunpack.c.l.b16 %v420
    %v1550 = vunpack.c.h.b16 %v420
    %v1551 = vunpack.c.l.b16 %v421
    %v1552 = vunpack.c.h.b16 %v421
    %v1553 = vunpack.c.l.b16 %v422
    %v1554 = vunpack.c.h.b16 %v422
    %v1555 = vunpack.c.l.b16 %v423
    %v1556 = vunpack.c.h.b16 %v423
    %v1557 = vunpack.c.l.b16 %v424
    %v1558 = vunpack.c.h.b16 %v424
    %v1559 = vunpack.c.l.b16 %v425
    %v1560 = vunpack.c.h.b16 %v425
    %v1561 = vunpack.c.l.b16 %v426
    %v1562 = vunpack.c.h.b16 %v426
    %v1563 = vunpack.c.l.b16 %v427
    %v1564 = vunpack.c.h.b16 %v427
    %v1565 = vunpack.c.l.b16 %v428
    %v1566 = vunpack.c.h.b16 %v428
    %v1567 = vunpack.c.l.b16 %v429
    %v1568 = vunpack.c.h.b16 %v429
    %v1569 = vunpack.c.l.b16 %v430
    %v1570 = vunpack.c.h.b16 %v430
    %v1571 = vunpack.c.l.b16 %v431
    %v1572 = vunpack.c.h.b16 %v431
    %v1573 = vunpack.c.l.b16 %v432
    %v1574 = vunpack.c.h.b16 %v432
    %v1575 = vunpack.c.l.b16 %v433
    %v1576 = vunpack.c.h.b16 %v433
    %v1577 = vunpack.c.l.b16 %v434
    %v1578 = vunpack.c.h.b16 %v434
    %v1579 = vunpack.c.l.b16 %v435
    %v1580 = vunpack.c.h.b16 %v435
    %v1581 = vunpack.c.l.b16 %v436
    %v1582 = vunpack.c.h.b16 %v436
    %v1583 = vunpack.c.l.b16 %v437
    %v1584 = vunpack.c.h.b16 %v437
    %v1585 = vunpack.c.l.b16 %v438
    %v1586 = vunpack.c.h.b16 %v438
    %v1587 = vunpack.c.l.b16 %v439
    %v1588 = vunpack.c.h.b16 %v439
    %v1589 = vunpack.c.l.b16 %v440
    %v1590 = vunpack.c.h.b16 %v440
    %v1591 = vunpack.c.l.b16 %v441
    %v1592 = vunpack.c.h.b16 %v441
    %v1593 = vunpack.c.l.b16 %v442
    %v1594 = vunpack.c.h.b16 %v442
    %v1595 = vunpack.c.l.b16 %v443
    %v1596 = vunpack.c.h.b16 %v443
    %v1597 = vunpack.c.l.b16 %v444
    %v1598 = vunpack.c.h.b16 %v444
    %v1599 = vunpack.c.l.b16 %v445
    %v1600 = vunpack.c.h.b16 %v445
    %v1601 = vunpack.c.l.b16 %v446
    %v1602 = vunpack.c.h.b16 %v446
    %v1603 = vunpack.c.l.b16 %v447
    %v1604 = vunpack.c.h.b16 %v447
    %v1605 = vunpack.c.l.b16 %v448
    %v1606 = vunpack.c.h.b16 %v448
    %v1607 = vunpack.c.l.b16 %v449
    %v1608 = vunpack.c.h.b16 %v449
    %v1609 = vunpack.c.l.b16 %v450
    %v1610 = vunpack.c.h.b16 %v450
    %v1611 = vunpack.c.l.b16 %v451
    %v1612 = vunpack.c.h.b16 %v451
    %v1613 = vunpack.c.l.b16 %v452
    %v1614 = vunpack.c.h.b16 %v452
    %v1615 = vunpack.c.l.b16 %v453
    %v1616 = vunpack.c.h.b16 %v453
    %v1617 = vunpack.c.l.b16 %v454
    %v1618 = vunpack.c.h.b16 %v454
    %v1619 = vunpack.c.l.b16 %v455
    %v1620 = vunpack.c.h.b16 %v455
    %v1621 = vunpack.c.l.b16 %v456
    %v1622 = vunpack.c.h.b16 %v456
    %v1623 = vunpack.c.l.b16 %v457
    %v1624 = vunpack.c.h.b16 %v457
    %v1625 = vunpack.c.l.b16 %v458
    %v1626 = vunpack.c.h.b16 %v458
    %v1627 = vunpack.c.l.b16 %v459
    %v1628 = vunpack.c.h.b16 %v459
    %v1629 = vunpack.c.l.b16 %v460
    %v1630 = vunpack.c.h.b16 %v460
    %v1631 = vunpack.c.l.b16 %v461
    %v1632 = vunpack.c.h.b16 %v461
    %v1633 = vunpack.c.l.b16 %v462
    %v1634 = vunpack.c.h.b16 %v462
    %v1635 = vunpack.c.l.b16 %v463
    %v1636 = vunpack.c.h.b16 %v463
    %v1637 = vpack.c.b16 %v877, %v869
    %v1638 = vpack.c.b16 %v878, %v870
    %v1639 = vpack.c.b16 %v879, %v871
    %v1640 = vpack.c.b16 %v880, %v872
    %v1641 = vpack.c.b16 %v881, %v873
    %v1642 = vpack.c.b16 %v882, %v874
    %v1643 = vpack.c.b16 %v883, %v875
    %v1644 = vpack.c.b16 %v884, %v876
    %v1645 = vpack.c.b16 %v893, %v885
    %v1646 = vpack.c.b16 %v894, %v886
    %v1647 = vpack.c.b16 %v895, %v887
    %v1648 = vpack.c.b16 %v896, %v888
    %v1649 = vpack.c.b16 %v897, %v889
    %v1650 = vpack.c.b16 %v898, %v890
    %v1651 = vpack.c.b16 %v899, %v891
    %v1652 = vpack.c.b16 %v900, %v892
    %v1653 = vpack.c.b16 %v909, %v901
    %v1654 = vpack.c.b16 %v910, %v902
    %v1655 = vpack.c.b16 %v911, %v903
    %v1656 = vpack.c.b16 %v912, %v904
    %v1657 = vpack.c.b16 %v913, %v905
    %v1658 = vpack.c.b16 %v914, %v906
    %v1659 = vpack.c.b16 %v915, %v907
    %v1660 = vpack.c.b16 %v916, %v908
    %v1661 = vpack.c.b16 %v925, %v917
    %v1662 = vpack.c.b16 %v926, %v918
    %v1663 = vpack.c.b16 %v927, %v919
    %v1664 = vpack.c.b16 %v928, %v920
    %v1665 = vpack.c.b16 %v929, %v921
    %v1666 = vpack.c.b16 %v930, %v922
    %v1667 = vpack.c.b16 %v931, %v923
    %v1668 = vpack.c.b16 %v932, %v924
    %v1669 = vpack.c.b16 %v941, %v933
    %v1670 = vpack.c.b16 %v942, %v934
    %v1671 = vpack.c.b16 %v943, %v935
    %v1672 = vpack.c.b16 %v944, %v936
    %v1673 = vpack.c.b16 %v945, %v937
    %v1674 = vpack.c.b16 %v946, %v938
    %v1675 = vpack.c.b16 %v947, %v939
    %v1676 = vpack.c.b16 %v948, %v940
    %v1677 = vpack.c.b16 %v957, %v949
    %v1678 = vpack.c.b16 %v958, %v950
    %v1679 = vpack.c.b16 %v959, %v951
    %v1680 = vpack.c.b16 %v960, %v952
    %v1681 = vpack.c.b16 %v961, %v953
    %v1682 = vpack.c.b16 %v962, %v954
    %v1683 = vpack.c.b16 %v963, %v955
    %v1684 = vpack.c.b16 %v964, %v956
    %v1685 = vpack.c.b16 %v973, %v965
    %v1686 = vpack.c.b16 %v974, %v966
    %v1687 = vpack.c.b16 %v975, %v967
    %v1688 = vpack.c.b16 %v976, %v968
    %v1689 = vpack.c.b16 %v977, %v969
    %v1690 = vpack.c.b16 %v978, %v970
    %v1691 = vpack.c.b16 %v979, %v971
    %v1692 = vpack.c.b16 %v980, %v972
    %v1693 = vpack.c.b16 %v989, %v981
    %v1694 = vpack.c.b16 %v990, %v982
    %v1695 = vpack.c.b16 %v991, %v983
    %v1696 = vpack.c.b16 %v992, %v984
    %v1697 = vpack.c.b16 %v993, %v985
    %v1698 = vpack.c.b16 %v994, %v986
    %v1699 = vpack.c.b16 %v995, %v987
    %v1700 = vpack.c.b16 %v996, %v988
    %v1701 = vpack.c.b16 %v1005, %v997
    %v1702 = vpack.c.b16 %v1006, %v998
    %v1703 = vpack.c.b16 %v1007, %v999
    %v1704 = vpack.c.b16 %v1008, %v1000
    %v1705 = vpack.c.b16 %v1009, %v1001
    %v1706 = vpack.c.b16 %v1010, %v1002
    %v1707 = vpack.c.b16 %v1011, %v1003
    %v1708 = vpack.c.b16 %v1012, %v1004
    %v1709 = vpack.c.b16 %v1021, %v1013
    %v1710 = vpack.c.b16 %v1022, %v1014
    %v1711 = vpack.c.b16 %v1023, %v1015
    %v1712 = vpack.c.b16 %v1024, %v1016
    %v1713 = vpack.c.b16 %v1025, %v1017
    %v1714 = vpack.c.b16 %v1026, %v1018
    %v1715 = vpack.c.b16 %v1027, %v1019
    %v1716 = vpack.c.b16 %v1028, %v1020
    %v1717 = vpack.c.b16 %v1037, %v1029
    %v1718 = vpack.c.b16 %v1038, %v1030
    %v1719 = vpack.c.b16 %v1039, %v1031
    %v1720 = vpack.c.b16 %v1040, %v1032
    %v1721 = vpack.c.b16 %v1041, %v1033
    %v1722 = vpack.c.b16 %v1042, %v1034
    %v1723 = vpack.c.b16 %v1043, %v1035
    %v1724 = vpack.c.b16 %v1044, %v1036
    %v1725 = vpack.c.b16 %v1053, %v1045
    %v1726 = vpack.c.b16 %v1054, %v1046
    %v1727 = vpack.c.b16 %v1055, %v1047
    %v1728 = vpack.c.b16 %v1056, %v1048
    %v1729 = vpack.c.b16 %v1057, %v1049
    %v1730 = vpack.c.b16 %v1058, %v1050
    %v1731 = vpack.c.b16 %v1059, %v1051
    %v1732 = vpack.c.b16 %v1060, %v1052
    %v1733 = vpack.c.b16 %v1069, %v1061
    %v1734 = vpack.c.b16 %v1070, %v1062
    %v1735 = vpack.c.b16 %v1071, %v1063
    %v1736 = vpack.c.b16 %v1072, %v1064
    %v1737 = vpack.c.b16 %v1073, %v1065
    %v1738 = vpack.c.b16 %v1074, %v1066
    %v1739 = vpack.c.b16 %v1075, %v1067
    %v1740 = vpack.c.b16 %v1076, %v1068
    %v1741 = vpack.c.b16 %v1085, %v1077
    %v1742 = vpack.c.b16 %v1086, %v1078
    %v1743 = vpack.c.b16 %v1087, %v1079
    %v1744 = vpack.c.b16 %v1088, %v1080
    %v1745 = vpack.c.b16 %v1089, %v1081
    %v1746 = vpack.c.b16 %v1090, %v1082
    %v1747 = vpack.c.b16 %v1091, %v1083
    %v1748 = vpack.c.b16 %v1092, %v1084
    %v1749 = vpack.c.b16 %v1101, %v1093
    %v1750 = vpack.c.b16 %v1102, %v1094
    %v1751 = vpack.c.b16 %v1103, %v1095
    %v1752 = vpack.c.b16 %v1104, %v1096
    %v1753 = vpack.c.b16 %v1105, %v1097
    %v1754 = vpack.c.b16 %v1106, %v1098
    %v1755 = vpack.c.b16 %v1107, %v1099
    %v1756 = vpack.c.b16 %v1108, %v1100
    %v1757 = vpack.c.b16 %v1117, %v1109
    %v1758 = vpack.c.b16 %v1118, %v1110
    %v1759 = vpack.c.b16 %v1119, %v1111
    %v1760 = vpack.c.b16 %v1120, %v1112
    %v1761 = vpack.c.b16 %v1121, %v1113
    %v1762 = vpack.c.b16 %v1122, %v1114
    %v1763 = vpack.c.b16 %v1123, %v1115
    %v1764 = vpack.c.b16 %v1124, %v1116
    %v1765 = vpack.c.b16 %v1133, %v1125
    %v1766 = vpack.c.b16 %v1134, %v1126
    %v1767 = vpack.c.b16 %v1135, %v1127
    %v1768 = vpack.c.b16 %v1136, %v1128
    %v1769 = vpack.c.b16 %v1137, %v1129
    %v1770 = vpack.c.b16 %v1138, %v1130
    %v1771 = vpack.c.b16 %v1139, %v1131
    %v1772 = vpack.c.b16 %v1140, %v1132
    %v1773 = vpack.c.b16 %v1149, %v1141
    %v1774 = vpack.c.b16 %v1150, %v1142
    %v1775 = vpack.c.b16 %v1151, %v1143
    %v1776 = vpack.c.b16 %v1152, %v1144
    %v1777 = vpack.c.b16 %v1153, %v1145
    %v1778 = vpack.c.b16 %v1154, %v1146
    %v1779 = vpack.c.b16 %v1155, %v1147
    %v1780 = vpack.c.b16 %v1156, %v1148
    %v1781 = vpack.c.b16 %v1165, %v1157
    %v1782 = vpack.c.b16 %v1166, %v1158
    %v1783 = vpack.c.b16 %v1167, %v1159
    %v1784 = vpack.c.b16 %v1168, %v1160
    %v1785 = vpack.c.b16 %v1169, %v1161
    %v1786 = vpack.c.b16 %v1170, %v1162
    %v1787 = vpack.c.b16 %v1171, %v1163
    %v1788 = vpack.c.b16 %v1172, %v1164
    %v1789 = vpack.c.b16 %v1181, %v1173
    %v1790 = vpack.c.b16 %v1182, %v1174
    %v1791 = vpack.c.b16 %v1183, %v1175
    %v1792 = vpack.c.b16 %v1184, %v1176
    %v1793 = vpack.c.b16 %v1185, %v1177
    %v1794 = vpack.c.b16 %v1186, %v1178
    %v1795 = vpack.c.b16 %v1187, %v1179
    %v1796 = vpack.c.b16 %v1188, %v1180
    %v1797 = vpack.c.b16 %v1197, %v1189
    %v1798 = vpack.c.b16 %v1198, %v1190
    %v1799 = vpack.c.b16 %v1199, %v1191
    %v1800 = vpack.c.b16 %v1200, %v1192
    %v1801 = vpack.c.b16 %v1201, %v1193
    %v1802 = vpack.c.b16 %v1202, %v1194
    %v1803 = vpack.c.b16 %v1203, %v1195
    %v1804 = vpack.c.b16 %v1204, %v1196
    %v1805 = vpack.c.b16 %v1213, %v1205
    %v1806 = vpack.c.b16 %v1214, %v1206
    %v1807 = vpack.c.b16 %v1215, %v1207
    %v1808 = vpack.c.b16 %v1216, %v1208
    %v1809 = vpack.c.b16 %v1217, %v1209
    %v1810 = vpack.c.b16 %v1218, %v1210
    %v1811 = vpack.c.b16 %v1219, %v1211
    %v1812 = vpack.c.b16 %v1220, %v1212
    %v1813 = vpack.c.b16 %v1229, %v1221
    %v1814 = vpack.c.b16 %v1230, %v1222
    %v1815 = vpack.c.b16 %v1231, %v1223
    %v1816 = vpack.c.b16 %v1232, %v1224
    %v1817 = vpack.c.b16 %v1233, %v1225
    %v1818 = vpack.c.b16 %v1234, %v1226
    %v1819 = vpack.c.b16 %v1235, %v1227
    %v1820 = vpack.c.b16 %v1236, %v1228
    %v1821 = vpack.c.b16 %v1245, %v1237
    %v1822 = vpack.c.b16 %v1246, %v1238
    %v1823 = vpack.c.b16 %v1247, %v1239
    %v1824 = vpack.c.b16 %v1248, %v1240
    %v1825 = vpack.c.b16 %v1249, %v1241
    %v1826 = vpack.c.b16 %v1250, %v1242
    %v1827 = vpack.c.b16 %v1251, %v1243
    %v1828 = vpack.c.b16 %v1252, %v1244
    %v1829 = vpack.c.b16 %v1261, %v1253
    %v1830 = vpack.c.b16 %v1262, %v1254
    %v1831 = vpack.c.b16 %v1263, %v1255
    %v1832 = vpack.c.b16 %v1264, %v1256
    %v1833 = vpack.c.b16 %v1265, %v1257
    %v1834 = vpack.c.b16 %v1266, %v1258
    %v1835 = vpack.c.b16 %v1267, %v1259
    %v1836 = vpack.c.b16 %v1268, %v1260
    %v1837 = vpack.c.b16 %v1277, %v1269
    %v1838 = vpack.c.b16 %v1278, %v1270
    %v1839 = vpack.c.b16 %v1279, %v1271
    %v1840 = vpack.c.b16 %v1280, %v1272
    %v1841 = vpack.c.b16 %v1281, %v1273
    %v1842 = vpack.c.b16 %v1282, %v1274
    %v1843 = vpack.c.b16 %v1283, %v1275
    %v1844 = vpack.c.b16 %v1284, %v1276
    %v1845 = vpack.c.b16 %v1293, %v1285
    %v1846 = vpack.c.b16 %v1294, %v1286
    %v1847 = vpack.c.b16 %v1295, %v1287
    %v1848 = vpack.c.b16 %v1296, %v1288
    %v1849 = vpack.c.b16 %v1297, %v1289
    %v1850 = vpack.c.b16 %v1298, %v1290
    %v1851 = vpack.c.b16 %v1299, %v1291
    %v1852 = vpack.c.b16 %v1300, %v1292
    %v1853 = vpack.c.b16 %v1309, %v1301
    %v1854 = vpack.c.b16 %v1310, %v1302
    %v1855 = vpack.c.b16 %v1311, %v1303
    %v1856 = vpack.c.b16 %v1312, %v1304
    %v1857 = vpack.c.b16 %v1313, %v1305
    %v1858 = vpack.c.b16 %v1314, %v1306
    %v1859 = vpack.c.b16 %v1315, %v1307
    %v1860 = vpack.c.b16 %v1316, %v1308
    %v1861 = vpack.c.b16 %v1325, %v1317
    %v1862 = vpack.c.b16 %v1326, %v1318
    %v1863 = vpack.c.b16 %v1327, %v1319
    %v1864 = vpack.c.b16 %v1328, %v1320
    %v1865 = vpack.c.b16 %v1329, %v1321
    %v1866 = vpack.c.b16 %v1330, %v1322
    %v1867 = vpack.c.b16 %v1331, %v1323
    %v1868 = vpack.c.b16 %v1332, %v1324
    %v1869 = vpack.c.b16 %v1341, %v1333
    %v1870 = vpack.c.b16 %v1342, %v1334
    %v1871 = vpack.c.b16 %v1343, %v1335
    %v1872 = vpack.c.b16 %v1344, %v1336
    %v1873 = vpack.c.b16 %v1345, %v1337
    %v1874 = vpack.c.b16 %v1346, %v1338
    %v1875 = vpack.c.b16 %v1347, %v1339
    %v1876 = vpack.c.b16 %v1348, %v1340
    %v1877 = vpack.c.b16 %v1357, %v1349
    %v1878 = vpack.c.b16 %v1358, %v1350
    %v1879 = vpack.c.b16 %v1359, %v1351
    %v1880 = vpack.c.b16 %v1360, %v1352
    %v1881 = vpack.c.b16 %v1361, %v1353
    %v1882 = vpack.c.b16 %v1362, %v1354
    %v1883 = vpack.c.b16 %v1363, %v1355
    %v1884 = vpack.c.b16 %v1364, %v1356
    %v1885 = vpack.c.b16 %v1373, %v1365
    %v1886 = vpack.c.b16 %v1374, %v1366
    %v1887 = vpack.c.b16 %v1375, %v1367
    %v1888 = vpack.c.b16 %v1376, %v1368
    %v1889 = vpack.c.b16 %v1377, %v1369
    %v1890 = vpack.c.b16 %v1378, %v1370
    %v1891 = vpack.c.b16 %v1379, %v1371
    %v1892 = vpack.c.b16 %v1380, %v1372
    %v1893 = vpack.c.b16 %v1389, %v1381
    %v1894 = vpack.c.b16 %v1390, %v1382
    %v1895 = vpack.c.b16 %v1391, %v1383
    %v1896 = vpack.c.b16 %v1392, %v1384
    %v1897 = vpack.c.b16 %v1393, %v1385
    %v1898 = vpack.c.b16 %v1394, %v1386
    %v1899 = vpack.c.b16 %v1395, %v1387
    %v1900 = vpack.c.b16 %v1396, %v1388
    %v1901 = vpack.c.b16 %v1405, %v1397
    %v1902 = vpack.c.b16 %v1406, %v1398
    %v1903 = vpack.c.b16 %v1407, %v1399
    %v1904 = vpack.c.b16 %v1408, %v1400
    %v1905 = vpack.c.b16 %v1409, %v1401
    %v1906 = vpack.c.b16 %v1410, %v1402
    %v1907 = vpack.c.b16 %v1411, %v1403
    %v1908 = vpack.c.b16 %v1412, %v1404
    %v1909 = vpack.c.b16 %v1421, %v1413
    %v1910 = vpack.c.b16 %v1422, %v1414
    %v1911 = vpack.c.b16 %v1423, %v1415
    %v1912 = vpack.c.b16 %v1424, %v1416
    %v1913 = vpack.c.b16 %v1425, %v1417
    %v1914 = vpack.c.b16 %v1426, %v1418
    %v1915 = vpack.c.b16 %v1427, %v1419
    %v1916 = vpack.c.b16 %v1428, %v1420
    %v1917 = vpack.c.b16 %v1437, %v1429
    %v1918 = vpack.c.b16 %v1438, %v1430
    %v1919 = vpack.c.b16 %v1439, %v1431
    %v1920 = vpack.c.b16 %v1440, %v1432
    %v1921 = vpack.c.b16 %v1441, %v1433
    %v1922 = vpack.c.b16 %v1442, %v1434
    %v1923 = vpack.c.b16 %v1443, %v1435
    %v1924 = vpack.c.b16 %v1444, %v1436
    %v1925 = vpack.c.b16 %v1453, %v1445
    %v1926 = vpack.c.b16 %v1454, %v1446
    %v1927 = vpack.c.b16 %v1455, %v1447
    %v1928 = vpack.c.b16 %v1456, %v1448
    %v1929 = vpack.c.b16 %v1457, %v1449
    %v1930 = vpack.c.b16 %v1458, %v1450
    %v1931 = vpack.c.b16 %v1459, %v1451
    %v1932 = vpack.c.b16 %v1460, %v1452
    %v1933 = vpack.c.b16 %v1469, %v1461
    %v1934 = vpack.c.b16 %v1470, %v1462
    %v1935 = vpack.c.b16 %v1471, %v1463
    %v1936 = vpack.c.b16 %v1472, %v1464
    %v1937 = vpack.c.b16 %v1473, %v1465
    %v1938 = vpack.c.b16 %v1474, %v1466
    %v1939 = vpack.c.b16 %v1475, %v1467
    %v1940 = vpack.c.b16 %v1476, %v1468
    %v1941 = vpack.c.b16 %v1485, %v1477
    %v1942 = vpack.c.b16 %v1486, %v1478
    %v1943 = vpack.c.b16 %v1487, %v1479
    %v1944 = vpack.c.b16 %v1488, %v1480
    %v1945 = vpack.c.b16 %v1489, %v1481
    %v1946 = vpack.c.b16 %v1490, %v1482
    %v1947 = vpack.c.b16 %v1491, %v1483
    %v1948 = vpack.c.b16 %v1492, %v1484
    %v1949 = vpack.c.b16 %v1501, %v1493
    %v1950 = vpack.c.b16 %v1502, %v1494
    %v1951 = vpack.c.b16 %v1503, %v1495
    %v1952 = vpack.c.b16 %v1504, %v1496
    %v1953 = vpack.c.b16 %v1505, %v1497
    %v1954 = vpack.c.b16 %v1506, %v1498
    %v1955 = vpack.c.b16 %v1507, %v1499
    %v1956 = vpack.c.b16 %v1508, %v1500
    %v1957 = vpack.c.b16 %v1517, %v1509
    %v1958 = vpack.c.b16 %v1518, %v1510
    %v1959 = vpack.c.b16 %v1519, %v1511
    %v1960 = vpack.c.b16 %v1520, %v1512
    %v1961 = vpack.c.b16 %v1521, %v1513
    %v1962 = vpack.c.b16 %v1522, %v1514
    %v1963 = vpack.c.b16 %v1523, %v1515
    %v1964 = vpack.c.b16 %v1524, %v1516
    %v1965 = vpack.c.b16 %v1533, %v1525
    %v1966 = vpack.c.b16 %v1534, %v1526
    %v1967 = vpack.c.b16 %v1535, %v1527
    %v1968 = vpack.c.b16 %v1536, %v1528
    %v1969 = vpack.c.b16 %v1537, %v1529
    %v1970 = vpack.c.b16 %v1538, %v1530
    %v1971 = vpack.c.b16 %v1539, %v1531
    %v1972 = vpack.c.b16 %v1540, %v1532
    %v1973 = vpack.c.b16 %v1549, %v1541
    %v1974 = vpack.c.b16 %v1550, %v1542
    %v1975 = vpack.c.b16 %v1551, %v1543
    %v1976 = vpack.c.b16 %v1552, %v1544
    %v1977 = vpack.c.b16 %v1553, %v1545
    %v1978 = vpack.c.b16 %v1554, %v1546
    %v1979 = vpack.c.b16 %v1555, %v1547
    %v1980 = vpack.c.b16 %v1556, %v1548
    %v1981 = vpack.c.b16 %v1565, %v1557
    %v1982 = vpack.c.b16 %v1566, %v1558
    %v1983 = vpack.c.b16 %v1567, %v1559
    %v1984 = vpack.c.b16 %v1568, %v1560
    %v1985 = vpack.c.b16 %v1569, %v1561
    %v1986 = vpack.c.b16 %v1570, %v1562
    %v1987 = vpack.c.b16 %v1571, %v1563
    %v1988 = vpack.c.b16 %v1572, %v1564
    %v1989 = vpack.c.b16 %v1581, %v1573
    %v1990 = vpack.c.b16 %v1582, %v1574
    %v1991 = vpack.c.b16 %v1583, %v1575
    %v1992 = vpack.c.b16 %v1584, %v1576
    %v1993 = vpack.c.b16 %v1585, %v1577
    %v1994 = vpack.c.b16 %v1586, %v1578
    %v1995 = vpack.c.b16 %v1587, %v1579
    %v1996 = vpack.c.b16 %v1588, %v1580
    %v1997 = vpack.c.b16 %v1597, %v1589
    %v1998 = vpack.c.b16 %v1598, %v1590
    %v1999 = vpack.c.b16 %v1599, %v1591
    %v2000 = vpack.c.b16 %v1600, %v1592
    %v2001 = vpack.c.b16 %v1601, %v1593
    %v2002 = vpack.c.b16 %v1602, %v1594
    %v2003 = vpack.c.b16 %v1603, %v1595
    %v2004 = vpack.c.b16 %v1604, %v1596
    %v2005 = vpack.c.b16 %v1613, %v1605
    %v2006 = vpack.c.b16 %v1614, %v1606
    %v2007 = vpack.c.b16 %v1615, %v1607
    %v2008 = vpack.c.b16 %v1616, %v1608
    %v2009 = vpack.c.b16 %v1617, %v1609
    %v2010 = vpack.c.b16 %v1618, %v1610
    %v2011 = vpack.c.b16 %v1619, %v1611
    %v2012 = vpack.c.b16 %v1620, %v1612
    %v2013 = vpack.c.b16 %v1629, %v1621
    %v2014 = vpack.c.b16 %v1630, %v1622
    %v2015 = vpack.c.b16 %v1631, %v1623
    %v2016 = vpack.c.b16 %v1632, %v1624
    %v2017 = vpack.c.b16 %v1633, %v1625
    %v2018 = vpack.c.b16 %v1634, %v1626
    %v2019 = vpack.c.b16 %v1635, %v1627
    %v2020 = vpack.c.b16 %v1636, %v1628
    %2405 = vmatprep.subr.bf16.mxu0 %v1638
    %2406 = vmatpush1.bf16.msra.mxu0 %v1637
    %2407 = vmatprep.subr.bf16.mxu0 %v1646
    %2408 = vmatpush1.bf16.msra.mxu0 %v1645
    %2409 = vmatprep.subr.bf16.mxu0 %v1654
    %2410 = vmatpush1.bf16.msra.mxu0 %v1653
    %2411 = vmatprep.subr.bf16.mxu0 %v1662
    %2412 = vmatpush1.bf16.msra.mxu0 %v1661
    %2413 = vmatprep.subr.bf16.mxu0 %v1670
    %2414 = vmatpush1.bf16.msra.mxu0 %v1669
    %2415 = vmatprep.subr.bf16.mxu0 %v1678
    %2416 = vmatpush1.bf16.msra.mxu0 %v1677
    %2417 = vmatprep.subr.bf16.mxu0 %v1686
    %2418 = vmatpush1.bf16.msra.mxu0 %v1685
    %2419 = vmatprep.subr.bf16.mxu0 %v1694
    %2420 = vmatpush1.bf16.msra.mxu0 %v1693
    %2421 = vmatprep.subr.bf16.mxu0 %v1702
    %2422 = vmatpush1.bf16.msra.mxu0 %v1701
    %2423 = vmatprep.subr.bf16.mxu0 %v1710
    %2424 = vmatpush1.bf16.msra.mxu0 %v1709
    %2425 = vmatprep.subr.bf16.mxu0 %v1718
    %2426 = vmatpush1.bf16.msra.mxu0 %v1717
    %2427 = vmatprep.subr.bf16.mxu0 %v1726
    %2428 = vmatpush1.bf16.msra.mxu0 %v1725
    %2429 = vmatprep.subr.bf16.mxu0 %v1734
    %2430 = vmatpush1.bf16.msra.mxu0 %v1733
    %2431 = vmatprep.subr.bf16.mxu0 %v1742
    %2432 = vmatpush1.bf16.msra.mxu0 %v1741
    %2433 = vmatprep.subr.bf16.mxu0 %v1750
    %2434 = vmatpush1.bf16.msra.mxu0 %v1749
    %2435 = vmatprep.subr.bf16.mxu0 %v1758
    %2436 = vmatpush1.bf16.msra.mxu0 %v1757
    %2437 = vmatprep.mubr.bf16.mxu0 %v474
    %2438 = vmatmul.mubr.bf16.gmra.mrb[0].mxu0 %v473
    %v2439 = vpop.f32.mrb[0].mxu0
    %v2440 = vadd.f32 0.0, %v2439
    %v2441 = vpop.f32.mrb[0].mxu0
    %v2442 = vadd.f32 0.0, %v2441
    %v2443 = vpop.f32.mrb[0].mxu0
    %v2444 = vpop.f32.mrb[0].mxu0
    %2445 = vdwg.mxu0
    %2446 = vmatprep.subr.bf16.mxu0 %v1766
    %2447 = vmatpush1.bf16.msra.mxu0 %v1765
    %2448 = vmatprep.subr.bf16.mxu0 %v1774
    %2449 = vmatpush1.bf16.msra.mxu0 %v1773
    %2450 = vmatprep.subr.bf16.mxu0 %v1782
    %2451 = vmatpush1.bf16.msra.mxu0 %v1781
    %2452 = vmatprep.subr.bf16.mxu0 %v1790
    %2453 = vmatpush1.bf16.msra.mxu0 %v1789
    %2454 = vmatprep.subr.bf16.mxu0 %v1798
    %2455 = vmatpush1.bf16.msra.mxu0 %v1797
    %2456 = vmatprep.subr.bf16.mxu0 %v1806
    %2457 = vmatpush1.bf16.msra.mxu0 %v1805
    %2458 = vmatprep.subr.bf16.mxu0 %v1814
    %2459 = vmatpush1.bf16.msra.mxu0 %v1813
    %2460 = vmatprep.subr.bf16.mxu0 %v1822
    %2461 = vmatpush1.bf16.msra.mxu0 %v1821
    %2462 = vmatprep.subr.bf16.mxu0 %v1830
    %2463 = vmatpush1.bf16.msra.mxu0 %v1829
    %2464 = vmatprep.subr.bf16.mxu0 %v1838
    %2465 = vmatpush1.bf16.msra.mxu0 %v1837
    %2466 = vmatprep.subr.bf16.mxu0 %v1846
    %2467 = vmatpush1.bf16.msra.mxu0 %v1845
    %2468 = vmatprep.subr.bf16.mxu0 %v1854
    %2469 = vmatpush1.bf16.msra.mxu0 %v1853
    %2470 = vmatprep.subr.bf16.mxu0 %v1862
    %2471 = vmatpush1.bf16.msra.mxu0 %v1861
    %2472 = vmatprep.subr.bf16.mxu0 %v1870
    %2473 = vmatpush1.bf16.msra.mxu0 %v1869
    %2474 = vmatprep.subr.bf16.mxu0 %v1878
    %2475 = vmatpush1.bf16.msra.mxu0 %v1877
    %2476 = vmatprep.subr.bf16.mxu0 %v1886
    %2477 = vmatpush1.bf16.msra.mxu0 %v1885
    %2478 = vmatprep.mubr.bf16.mxu0 %v476
    %2479 = vmatmul.mubr.bf16.gmra.mrb[0].mxu0 %v475
    %v2480 = vpop.f32.mrb[0].mxu0
    %v2481 = vadd.f32 %v2440, %v2480
    %v2482 = vpop.f32.mrb[0].mxu0
    %v2483 = vadd.f32 %v2442, %v2482
    %v2484 = vpop.f32.mrb[0].mxu0
    %v2485 = vpop.f32.mrb[0].mxu0
    %2486 = vdwg.mxu0
    %2487 = vmatprep.subr.bf16.mxu0 %v1894
    %2488 = vmatpush1.bf16.msra.mxu0 %v1893
    %2489 = vmatprep.subr.bf16.mxu0 %v1902
    %2490 = vmatpush1.bf16.msra.mxu0 %v1901
    %2491 = vmatprep.subr.bf16.mxu0 %v1910
    %2492 = vmatpush1.bf16.msra.mxu0 %v1909
    %2493 = vmatprep.subr.bf16.mxu0 %v1918
    %2494 = vmatpush1.bf16.msra.mxu0 %v1917
    %2495 = vmatprep.subr.bf16.mxu0 %v1926
    %2496 = vmatpush1.bf16.msra.mxu0 %v1925
    %2497 = vmatprep.subr.bf16.mxu0 %v1934
    %2498 = vmatpush1.bf16.msra.mxu0 %v1933
    %2499 = vmatprep.subr.bf16.mxu0 %v1942
    %2500 = vmatpush1.bf16.msra.mxu0 %v1941
    %2501 = vmatprep.subr.bf16.mxu0 %v1950
    %2502 = vmatpush1.bf16.msra.mxu0 %v1949
    %2503 = vmatprep.subr.bf16.mxu0 %v1958
    %2504 = vmatpush1.bf16.msra.mxu0 %v1957
    %2505 = vmatprep.subr.bf16.mxu0 %v1966
    %2506 = vmatpush1.bf16.msra.mxu0 %v1965
    %2507 = vmatprep.subr.bf16.mxu0 %v1974
    %2508 = vmatpush1.bf16.msra.mxu0 %v1973
    %2509 = vmatprep.subr.bf16.mxu0 %v1982
    %2510 = vmatpush1.bf16.msra.mxu0 %v1981
    %2511 = vmatprep.subr.bf16.mxu0 %v1990
    %2512 = vmatpush1.bf16.msra.mxu0 %v1989
    %2513 = vmatprep.subr.bf16.mxu0 %v1998
    %2514 = vmatpush1.bf16.msra.mxu0 %v1997
    %2515 = vmatprep.subr.bf16.mxu0 %v2006
    %2516 = vmatpush1.bf16.msra.mxu0 %v2005
    %2517 = vmatprep.subr.bf16.mxu0 %v2014
    %2518 = vmatpush1.bf16.msra.mxu0 %v2013
    %2519 = vmatprep.mubr.bf16.mxu0 %v478
    %2520 = vmatmul.mubr.bf16.gmra.mrb[0].mxu0 %v477
    %v2521 = vpop.f32.mrb[0].mxu0
    %v2522 = vadd.f32 %v2481, %v2521
    %v2523 = vpop.f32.mrb[0].mxu0
    %v2524 = vadd.f32 %v2483, %v2523
    %v2525 = vpop.f32.mrb[0].mxu0
    %v2526 = vpop.f32.mrb[0].mxu0
    %2527 = vdwg.mxu0
    %2528 = vmatprep.subr.bf16.mxu0 %v1640
    %2529 = vmatpush1.bf16.msra.mxu0 %v1639
    %2530 = vmatprep.subr.bf16.mxu0 %v1648
    %2531 = vmatpush1.bf16.msra.mxu0 %v1647
    %2532 = vmatprep.subr.bf16.mxu0 %v1656
    %2533 = vmatpush1.bf16.msra.mxu0 %v1655
    %2534 = vmatprep.subr.bf16.mxu0 %v1664
    %2535 = vmatpush1.bf16.msra.mxu0 %v1663
    %2536 = vmatprep.subr.bf16.mxu0 %v1672
    %2537 = vmatpush1.bf16.msra.mxu0 %v1671
    %2538 = vmatprep.subr.bf16.mxu0 %v1680
    %2539 = vmatpush1.bf16.msra.mxu0 %v1679
    %2540 = vmatprep.subr.bf16.mxu0 %v1688
    %2541 = vmatpush1.bf16.msra.mxu0 %v1687
    %2542 = vmatprep.subr.bf16.mxu0 %v1696
    %2543 = vmatpush1.bf16.msra.mxu0 %v1695
    %2544 = vmatprep.subr.bf16.mxu0 %v1704
    %2545 = vmatpush1.bf16.msra.mxu0 %v1703
    %2546 = vmatprep.subr.bf16.mxu0 %v1712
    %2547 = vmatpush1.bf16.msra.mxu0 %v1711
    %2548 = vmatprep.subr.bf16.mxu0 %v1720
    %2549 = vmatpush1.bf16.msra.mxu0 %v1719
    %2550 = vmatprep.subr.bf16.mxu0 %v1728
    %2551 = vmatpush1.bf16.msra.mxu0 %v1727
    %2552 = vmatprep.subr.bf16.mxu0 %v1736
    %2553 = vmatpush1.bf16.msra.mxu0 %v1735
    %2554 = vmatprep.subr.bf16.mxu0 %v1744
    %2555 = vmatpush1.bf16.msra.mxu0 %v1743
    %2556 = vmatprep.subr.bf16.mxu0 %v1752
    %2557 = vmatpush1.bf16.msra.mxu0 %v1751
    %2558 = vmatprep.subr.bf16.mxu0 %v1760
    %2559 = vmatpush1.bf16.msra.mxu0 %v1759
    %2560 = vmatprep.mubr.bf16.mxu0 %v474
    %2561 = vmatmul.mubr.bf16.gmra.mrb[0].mxu0 %v473
    %v2562 = vpop.f32.mrb[0].mxu0
    %v2563 = vadd.f32 0.0, %v2562
    %v2564 = vpop.f32.mrb[0].mxu0
    %v2565 = vadd.f32 0.0, %v2564
    %v2566 = vpop.f32.mrb[0].mxu0
    %v2567 = vpop.f32.mrb[0].mxu0
    %2568 = vdwg.mxu0
    %2569 = vmatprep.subr.bf16.mxu0 %v1768
    %2570 = vmatpush1.bf16.msra.mxu0 %v1767
    %2571 = vmatprep.subr.bf16.mxu0 %v1776
    %2572 = vmatpush1.bf16.msra.mxu0 %v1775
    %2573 = vmatprep.subr.bf16.mxu0 %v1784
    %2574 = vmatpush1.bf16.msra.mxu0 %v1783
    %2575 = vmatprep.subr.bf16.mxu0 %v1792
    %2576 = vmatpush1.bf16.msra.mxu0 %v1791
    %2577 = vmatprep.subr.bf16.mxu0 %v1800
    %2578 = vmatpush1.bf16.msra.mxu0 %v1799
    %2579 = vmatprep.subr.bf16.mxu0 %v1808
    %2580 = vmatpush1.bf16.msra.mxu0 %v1807
    %2581 = vmatprep.subr.bf16.mxu0 %v1816
    %2582 = vmatpush1.bf16.msra.mxu0 %v1815
    %2583 = vmatprep.subr.bf16.mxu0 %v1824
    %2584 = vmatpush1.bf16.msra.mxu0 %v1823
    %2585 = vmatprep.subr.bf16.mxu0 %v1832
    %2586 = vmatpush1.bf16.msra.mxu0 %v1831
    %2587 = vmatprep.subr.bf16.mxu0 %v1840
    %2588 = vmatpush1.bf16.msra.mxu0 %v1839
    %2589 = vmatprep.subr.bf16.mxu0 %v1848
    %2590 = vmatpush1.bf16.msra.mxu0 %v1847
    %2591 = vmatprep.subr.bf16.mxu0 %v1856
    %2592 = vmatpush1.bf16.msra.mxu0 %v1855
    %2593 = vmatprep.subr.bf16.mxu0 %v1864
    %2594 = vmatpush1.bf16.msra.mxu0 %v1863
    %2595 = vmatprep.subr.bf16.mxu0 %v1872
    %2596 = vmatpush1.bf16.msra.mxu0 %v1871
    %2597 = vmatprep.subr.bf16.mxu0 %v1880
    %2598 = vmatpush1.bf16.msra.mxu0 %v1879
    %2599 = vmatprep.subr.bf16.mxu0 %v1888
    %2600 = vmatpush1.bf16.msra.mxu0 %v1887
    %2601 = vmatprep.mubr.bf16.mxu0 %v476
    %2602 = vmatmul.mubr.bf16.gmra.mrb[0].mxu0 %v475
    %v2603 = vpop.f32.mrb[0].mxu0
    %v2604 = vadd.f32 %v2563, %v2603
    %v2605 = vpop.f32.mrb[0].mxu0
    %v2606 = vadd.f32 %v2565, %v2605
    %v2607 = vpop.f32.mrb[0].mxu0
    %v2608 = vpop.f32.mrb[0].mxu0
    %2609 = vdwg.mxu0
    %2610 = vmatprep.subr.bf16.mxu0 %v1896
    %2611 = vmatpush1.bf16.msra.mxu0 %v1895
    %2612 = vmatprep.subr.bf16.mxu0 %v1904
    %2613 = vmatpush1.bf16.msra.mxu0 %v1903
    %2614 = vmatprep.subr.bf16.mxu0 %v1912
    %2615 = vmatpush1.bf16.msra.mxu0 %v1911
    %2616 = vmatprep.subr.bf16.mxu0 %v1920
    %2617 = vmatpush1.bf16.msra.mxu0 %v1919
    %2618 = vmatprep.subr.bf16.mxu0 %v1928
    %2619 = vmatpush1.bf16.msra.mxu0 %v1927
    %2620 = vmatprep.subr.bf16.mxu0 %v1936
    %2621 = vmatpush1.bf16.msra.mxu0 %v1935
    %2622 = vmatprep.subr.bf16.mxu0 %v1944
    %2623 = vmatpush1.bf16.msra.mxu0 %v1943
    %2624 = vmatprep.subr.bf16.mxu0 %v1952
    %2625 = vmatpush1.bf16.msra.mxu0 %v1951
    %2626 = vmatprep.subr.bf16.mxu0 %v1960
    %2627 = vmatpush1.bf16.msra.mxu0 %v1959
    %2628 = vmatprep.subr.bf16.mxu0 %v1968
    %2629 = vmatpush1.bf16.msra.mxu0 %v1967
    %2630 = vmatprep.subr.bf16.mxu0 %v1976
    %2631 = vmatpush1.bf16.msra.mxu0 %v1975
    %2632 = vmatprep.subr.bf16.mxu0 %v1984
    %2633 = vmatpush1.bf16.msra.mxu0 %v1983
    %2634 = vmatprep.subr.bf16.mxu0 %v1992
    %2635 = vmatpush1.bf16.msra.mxu0 %v1991
    %2636 = vmatprep.subr.bf16.mxu0 %v2000
    %2637 = vmatpush1.bf16.msra.mxu0 %v1999
    %2638 = vmatprep.subr.bf16.mxu0 %v2008
    %2639 = vmatpush1.bf16.msra.mxu0 %v2007
    %2640 = vmatprep.subr.bf16.mxu0 %v2016
    %2641 = vmatpush1.bf16.msra.mxu0 %v2015
    %2642 = vmatprep.mubr.bf16.mxu0 %v478
    %2643 = vmatmul.mubr.bf16.gmra.mrb[0].mxu0 %v477
    %v2644 = vpop.f32.mrb[0].mxu0
    %v2645 = vadd.f32 %v2604, %v2644
    %v2646 = vpop.f32.mrb[0].mxu0
    %v2647 = vadd.f32 %v2606, %v2646
    %v2648 = vpop.f32.mrb[0].mxu0
    %v2649 = vpop.f32.mrb[0].mxu0
    %2650 = vdwg.mxu0
    %2651 = vmatprep.subr.bf16.mxu0 %v1642
    %2652 = vmatpush1.bf16.msra.mxu0 %v1641
    %2653 = vmatprep.subr.bf16.mxu0 %v1650
    %2654 = vmatpush1.bf16.msra.mxu0 %v1649
    %2655 = vmatprep.subr.bf16.mxu0 %v1658
    %2656 = vmatpush1.bf16.msra.mxu0 %v1657
    %2657 = vmatprep.subr.bf16.mxu0 %v1666
    %2658 = vmatpush1.bf16.msra.mxu0 %v1665
    %2659 = vmatprep.subr.bf16.mxu0 %v1674
    %2660 = vmatpush1.bf16.msra.mxu0 %v1673
    %2661 = vmatprep.subr.bf16.mxu0 %v1682
    %2662 = vmatpush1.bf16.msra.mxu0 %v1681
    %2663 = vmatprep.subr.bf16.mxu0 %v1690
    %2664 = vmatpush1.bf16.msra.mxu0 %v1689
    %2665 = vmatprep.subr.bf16.mxu0 %v1698
    %2666 = vmatpush1.bf16.msra.mxu0 %v1697
    %2667 = vmatprep.subr.bf16.mxu0 %v1706
    %2668 = vmatpush1.bf16.msra.mxu0 %v1705
    %2669 = vmatprep.subr.bf16.mxu0 %v1714
    %2670 = vmatpush1.bf16.msra.mxu0 %v1713
    %2671 = vmatprep.subr.bf16.mxu0 %v1722
    %2672 = vmatpush1.bf16.msra.mxu0 %v1721
    %2673 = vmatprep.subr.bf16.mxu0 %v1730
    %2674 = vmatpush1.bf16.msra.mxu0 %v1729
    %2675 = vmatprep.subr.bf16.mxu0 %v1738
    %2676 = vmatpush1.bf16.msra.mxu0 %v1737
    %2677 = vmatprep.subr.bf16.mxu0 %v1746
    %2678 = vmatpush1.bf16.msra.mxu0 %v1745
    %2679 = vmatprep.subr.bf16.mxu0 %v1754
    %2680 = vmatpush1.bf16.msra.mxu0 %v1753
    %2681 = vmatprep.subr.bf16.mxu0 %v1762
    %2682 = vmatpush1.bf16.msra.mxu0 %v1761
    %2683 = vmatprep.mubr.bf16.mxu0 %v474
    %2684 = vmatmul.mubr.bf16.gmra.mrb[0].mxu0 %v473
    %v2685 = vpop.f32.mrb[0].mxu0
    %v2686 = vadd.f32 0.0, %v2685
    %v2687 = vpop.f32.mrb[0].mxu0
    %v2688 = vadd.f32 0.0, %v2687
    %v2689 = vpop.f32.mrb[0].mxu0
    %v2690 = vpop.f32.mrb[0].mxu0
    %2691 = vdwg.mxu0
    %2692 = vmatprep.subr.bf16.mxu0 %v1770
    %2693 = vmatpush1.bf16.msra.mxu0 %v1769
    %2694 = vmatprep.subr.bf16.mxu0 %v1778
    %2695 = vmatpush1.bf16.msra.mxu0 %v1777
    %2696 = vmatprep.subr.bf16.mxu0 %v1786
    %2697 = vmatpush1.bf16.msra.mxu0 %v1785
    %2698 = vmatprep.subr.bf16.mxu0 %v1794
    %2699 = vmatpush1.bf16.msra.mxu0 %v1793
    %2700 = vmatprep.subr.bf16.mxu0 %v1802
    %2701 = vmatpush1.bf16.msra.mxu0 %v1801
    %2702 = vmatprep.subr.bf16.mxu0 %v1810
    %2703 = vmatpush1.bf16.msra.mxu0 %v1809
    %2704 = vmatprep.subr.bf16.mxu0 %v1818
    %2705 = vmatpush1.bf16.msra.mxu0 %v1817
    %2706 = vmatprep.subr.bf16.mxu0 %v1826
    %2707 = vmatpush1.bf16.msra.mxu0 %v1825
    %2708 = vmatprep.subr.bf16.mxu0 %v1834
    %2709 = vmatpush1.bf16.msra.mxu0 %v1833
    %2710 = vmatprep.subr.bf16.mxu0 %v1842
    %2711 = vmatpush1.bf16.msra.mxu0 %v1841
    %2712 = vmatprep.subr.bf16.mxu0 %v1850
    %2713 = vmatpush1.bf16.msra.mxu0 %v1849
    %2714 = vmatprep.subr.bf16.mxu0 %v1858
    %2715 = vmatpush1.bf16.msra.mxu0 %v1857
    %2716 = vmatprep.subr.bf16.mxu0 %v1866
    %2717 = vmatpush1.bf16.msra.mxu0 %v1865
    %2718 = vmatprep.subr.bf16.mxu0 %v1874
    %2719 = vmatpush1.bf16.msra.mxu0 %v1873
    %2720 = vmatprep.subr.bf16.mxu0 %v1882
    %2721 = vmatpush1.bf16.msra.mxu0 %v1881
    %2722 = vmatprep.subr.bf16.mxu0 %v1890
    %2723 = vmatpush1.bf16.msra.mxu0 %v1889
    %2724 = vmatprep.mubr.bf16.mxu0 %v476
    %2725 = vmatmul.mubr.bf16.gmra.mrb[0].mxu0 %v475
    %v2726 = vpop.f32.mrb[0].mxu0
    %v2727 = vadd.f32 %v2686, %v2726
    %v2728 = vpop.f32.mrb[0].mxu0
    %v2729 = vadd.f32 %v2688, %v2728
    %v2730 = vpop.f32.mrb[0].mxu0
    %v2731 = vpop.f32.mrb[0].mxu0
    %2732 = vdwg.mxu0
    %2733 = vmatprep.subr.bf16.mxu0 %v1898
    %2734 = vmatpush1.bf16.msra.mxu0 %v1897
    %2735 = vmatprep.subr.bf16.mxu0 %v1906
    %2736 = vmatpush1.bf16.msra.mxu0 %v1905
    %2737 = vmatprep.subr.bf16.mxu0 %v1914
    %2738 = vmatpush1.bf16.msra.mxu0 %v1913
    %2739 = vmatprep.subr.bf16.mxu0 %v1922
    %2740 = vmatpush1.bf16.msra.mxu0 %v1921
    %2741 = vmatprep.subr.bf16.mxu0 %v1930
    %2742 = vmatpush1.bf16.msra.mxu0 %v1929
    %2743 = vmatprep.subr.bf16.mxu0 %v1938
    %2744 = vmatpush1.bf16.msra.mxu0 %v1937
    %2745 = vmatprep.subr.bf16.mxu0 %v1946
    %2746 = vmatpush1.bf16.msra.mxu0 %v1945
    %2747 = vmatprep.subr.bf16.mxu0 %v1954
    %2748 = vmatpush1.bf16.msra.mxu0 %v1953
    %2749 = vmatprep.subr.bf16.mxu0 %v1962
    %2750 = vmatpush1.bf16.msra.mxu0 %v1961
    %2751 = vmatprep.subr.bf16.mxu0 %v1970
    %2752 = vmatpush1.bf16.msra.mxu0 %v1969
    %2753 = vmatprep.subr.bf16.mxu0 %v1978
    %2754 = vmatpush1.bf16.msra.mxu0 %v1977
    %2755 = vmatprep.subr.bf16.mxu0 %v1986
    %2756 = vmatpush1.bf16.msra.mxu0 %v1985
    %2757 = vmatprep.subr.bf16.mxu0 %v1994
    %2758 = vmatpush1.bf16.msra.mxu0 %v1993
    %2759 = vmatprep.subr.bf16.mxu0 %v2002
    %2760 = vmatpush1.bf16.msra.mxu0 %v2001
    %2761 = vmatprep.subr.bf16.mxu0 %v2010
    %2762 = vmatpush1.bf16.msra.mxu0 %v2009
    %2763 = vmatprep.subr.bf16.mxu0 %v2018
    %2764 = vmatpush1.bf16.msra.mxu0 %v2017
    %2765 = vmatprep.mubr.bf16.mxu0 %v478
    %2766 = vmatmul.mubr.bf16.gmra.mrb[0].mxu0 %v477
    %v2767 = vpop.f32.mrb[0].mxu0
    %v2768 = vadd.f32 %v2727, %v2767
    %v2769 = vpop.f32.mrb[0].mxu0
    %v2770 = vadd.f32 %v2729, %v2769
    %v2771 = vpop.f32.mrb[0].mxu0
    %v2772 = vpop.f32.mrb[0].mxu0
    %2773 = vdwg.mxu0
    %2774 = vmatprep.subr.bf16.mxu0 %v1644
    %2775 = vmatpush1.bf16.msra.mxu0 %v1643
    %2776 = vmatprep.subr.bf16.mxu0 %v1652
    %2777 = vmatpush1.bf16.msra.mxu0 %v1651
    %2778 = vmatprep.subr.bf16.mxu0 %v1660
    %2779 = vmatpush1.bf16.msra.mxu0 %v1659
    %2780 = vmatprep.subr.bf16.mxu0 %v1668
    %2781 = vmatpush1.bf16.msra.mxu0 %v1667
    %2782 = vmatprep.subr.bf16.mxu0 %v1676
    %2783 = vmatpush1.bf16.msra.mxu0 %v1675
    %2784 = vmatprep.subr.bf16.mxu0 %v1684
    %2785 = vmatpush1.bf16.msra.mxu0 %v1683
    %2786 = vmatprep.subr.bf16.mxu0 %v1692
    %2787 = vmatpush1.bf16.msra.mxu0 %v1691
    %2788 = vmatprep.subr.bf16.mxu0 %v1700
    %2789 = vmatpush1.bf16.msra.mxu0 %v1699
    %2790 = vmatprep.subr.bf16.mxu0 %v1708
    %2791 = vmatpush1.bf16.msra.mxu0 %v1707
    %2792 = vmatprep.subr.bf16.mxu0 %v1716
    %2793 = vmatpush1.bf16.msra.mxu0 %v1715
    %2794 = vmatprep.subr.bf16.mxu0 %v1724
    %2795 = vmatpush1.bf16.msra.mxu0 %v1723
    %2796 = vmatprep.subr.bf16.mxu0 %v1732
    %2797 = vmatpush1.bf16.msra.mxu0 %v1731
    %2798 = vmatprep.subr.bf16.mxu0 %v1740
    %2799 = vmatpush1.bf16.msra.mxu0 %v1739
    %2800 = vmatprep.subr.bf16.mxu0 %v1748
    %2801 = vmatpush1.bf16.msra.mxu0 %v1747
    %2802 = vmatprep.subr.bf16.mxu0 %v1756
    %2803 = vmatpush1.bf16.msra.mxu0 %v1755
    %2804 = vmatprep.subr.bf16.mxu0 %v1764
    %2805 = vmatpush1.bf16.msra.mxu0 %v1763
    %2806 = vmatprep.mubr.bf16.mxu0 %v474
    %2807 = vmatmul.mubr.bf16.gmra.mrb[0].mxu0 %v473
    %v2808 = vpop.f32.mrb[0].mxu0
    %v2809 = vadd.f32 0.0, %v2808
    %v2810 = vpop.f32.mrb[0].mxu0
    %v2811 = vadd.f32 0.0, %v2810
    %v2812 = vpop.f32.mrb[0].mxu0
    %v2813 = vpop.f32.mrb[0].mxu0
    %2814 = vdwg.mxu0
    %2815 = vmatprep.subr.bf16.mxu0 %v1772
    %2816 = vmatpush1.bf16.msra.mxu0 %v1771
    %2817 = vmatprep.subr.bf16.mxu0 %v1780
    %2818 = vmatpush1.bf16.msra.mxu0 %v1779
    %2819 = vmatprep.subr.bf16.mxu0 %v1788
    %2820 = vmatpush1.bf16.msra.mxu0 %v1787
    %2821 = vmatprep.subr.bf16.mxu0 %v1796
    %2822 = vmatpush1.bf16.msra.mxu0 %v1795
    %2823 = vmatprep.subr.bf16.mxu0 %v1804
    %2824 = vmatpush1.bf16.msra.mxu0 %v1803
    %2825 = vmatprep.subr.bf16.mxu0 %v1812
    %2826 = vmatpush1.bf16.msra.mxu0 %v1811
    %2827 = vmatprep.subr.bf16.mxu0 %v1820
    %2828 = vmatpush1.bf16.msra.mxu0 %v1819
    %2829 = vmatprep.subr.bf16.mxu0 %v1828
    %2830 = vmatpush1.bf16.msra.mxu0 %v1827
    %2831 = vmatprep.subr.bf16.mxu0 %v1836
    %2832 = vmatpush1.bf16.msra.mxu0 %v1835
    %2833 = vmatprep.subr.bf16.mxu0 %v1844
    %2834 = vmatpush1.bf16.msra.mxu0 %v1843
    %2835 = vmatprep.subr.bf16.mxu0 %v1852
    %2836 = vmatpush1.bf16.msra.mxu0 %v1851
    %2837 = vmatprep.subr.bf16.mxu0 %v1860
    %2838 = vmatpush1.bf16.msra.mxu0 %v1859
    %2839 = vmatprep.subr.bf16.mxu0 %v1868
    %2840 = vmatpush1.bf16.msra.mxu0 %v1867
    %2841 = vmatprep.subr.bf16.mxu0 %v1876
    %2842 = vmatpush1.bf16.msra.mxu0 %v1875
    %2843 = vmatprep.subr.bf16.mxu0 %v1884
    %2844 = vmatpush1.bf16.msra.mxu0 %v1883
    %2845 = vmatprep.subr.bf16.mxu0 %v1892
    %2846 = vmatpush1.bf16.msra.mxu0 %v1891
    %2847 = vmatprep.mubr.bf16.mxu0 %v476
    %2848 = vmatmul.mubr.bf16.gmra.mrb[0].mxu0 %v475
    %v2849 = vpop.f32.mrb[0].mxu0
    %v2850 = vadd.f32 %v2809, %v2849
    %v2851 = vpop.f32.mrb[0].mxu0
    %v2852 = vadd.f32 %v2811, %v2851
    %v2853 = vpop.f32.mrb[0].mxu0
    %v2854 = vpop.f32.mrb[0].mxu0
    %2855 = vdwg.mxu0
    %2856 = vmatprep.subr.bf16.mxu0 %v1900
    %2857 = vmatpush1.bf16.msra.mxu0 %v1899
    %2858 = vmatprep.subr.bf16.mxu0 %v1908
    %2859 = vmatpush1.bf16.msra.mxu0 %v1907
    %2860 = vmatprep.subr.bf16.mxu0 %v1916
    %2861 = vmatpush1.bf16.msra.mxu0 %v1915
    %2862 = vmatprep.subr.bf16.mxu0 %v1924
    %2863 = vmatpush1.bf16.msra.mxu0 %v1923
    %2864 = vmatprep.subr.bf16.mxu0 %v1932
    %2865 = vmatpush1.bf16.msra.mxu0 %v1931
    %2866 = vmatprep.subr.bf16.mxu0 %v1940
    %2867 = vmatpush1.bf16.msra.mxu0 %v1939
    %2868 = vmatprep.subr.bf16.mxu0 %v1948
    %2869 = vmatpush1.bf16.msra.mxu0 %v1947
    %2870 = vmatprep.subr.bf16.mxu0 %v1956
    %2871 = vmatpush1.bf16.msra.mxu0 %v1955
    %2872 = vmatprep.subr.bf16.mxu0 %v1964
    %2873 = vmatpush1.bf16.msra.mxu0 %v1963
    %2874 = vmatprep.subr.bf16.mxu0 %v1972
    %2875 = vmatpush1.bf16.msra.mxu0 %v1971
    %2876 = vmatprep.subr.bf16.mxu0 %v1980
    %2877 = vmatpush1.bf16.msra.mxu0 %v1979
    %2878 = vmatprep.subr.bf16.mxu0 %v1988
    %2879 = vmatpush1.bf16.msra.mxu0 %v1987
    %2880 = vmatprep.subr.bf16.mxu0 %v1996
    %2881 = vmatpush1.bf16.msra.mxu0 %v1995
    %2882 = vmatprep.subr.bf16.mxu0 %v2004
    %2883 = vmatpush1.bf16.msra.mxu0 %v2003
    %2884 = vmatprep.subr.bf16.mxu0 %v2012
    %2885 = vmatpush1.bf16.msra.mxu0 %v2011
    %2886 = vmatprep.subr.bf16.mxu0 %v2020
    %2887 = vmatpush1.bf16.msra.mxu0 %v2019
    %2888 = vmatprep.mubr.bf16.mxu0 %v478
    %2889 = vmatmul.mubr.bf16.gmra.mrb[0].mxu0 %v477
    %v2890 = vpop.f32.mrb[0].mxu0
    %v2891 = vadd.f32 %v2850, %v2890
    %v2892 = vpop.f32.mrb[0].mxu0
    %v2893 = vadd.f32 %v2852, %v2892
    %v2894 = vpop.f32.mrb[0].mxu0
    %v2895 = vpop.f32.mrb[0].mxu0
    %2896 = vdwg.mxu0
    %v2897 = vadd.f32 %v69, %v2522
    %v2898 = vadd.f32 %v70, %v2524
    %v2899 = vadd.f32 %v71, %v2645
    %v2900 = vadd.f32 %v72, %v2647
    %v2901 = vadd.f32 %v73, %v2768
    %v2902 = vadd.f32 %v74, %v2770
    %v2903 = vadd.f32 %v75, %v2891
    %v2904 = vadd.f32 %v76, %v2893
    %2905 = vst [vmem:[#allocation2] sm:$0xff] %v2897
    %2906 = vst [vmem:[#allocation2 + $0x8] sm:$0xff] %v2898
    %2907 = vst [vmem:[#allocation2 + $0x10] sm:$0xff] %v2899
    %2908 = vst [vmem:[#allocation2 + $0x18] sm:$0xff] %v2900
    %2909 = vst [vmem:[#allocation2 + $0x20] sm:$0xff] %v2901
    %2910 = vst [vmem:[#allocation2 + $0x28] sm:$0xff] %v2902
    %2911 = vst [vmem:[#allocation2 + $0x30] sm:$0xff] %v2903
    %2912 = vst [vmem:[#allocation2 + $0x38] sm:$0xff] %v2904
    // Predicated region
    $region34: #{clip_classifier_forward.1} parent=1 // pred_check
      %p2913 = pneg %p57
    $region35: #{clip_classifier_forward.1} parent=1 // pred_check_branch
      %2915 = sbr.rel (%p2913) target = $region37
    $region36: #{clip_classifier_forward.1} parent=1 // pred_region
      %v2916 = vld [vmem:[#allocation2] sm:$0xff]
      %v2917 = vld [vmem:[#allocation2 + $0x8] sm:$0xff]
      %v2918 = vld [vmem:[#allocation2 + $0x10] sm:$0xff]
      %v2919 = vld [vmem:[#allocation2 + $0x18] sm:$0xff]
      %v2920 = vld [vmem:[#allocation2 + $0x20] sm:$0xff]
      %v2921 = vld [vmem:[#allocation2 + $0x28] sm:$0xff]
      %v2922 = vld [vmem:[#allocation2 + $0x30] sm:$0xff]
      %v2923 = vld [vmem:[#allocation2 + $0x38] sm:$0xff]
      %v2924 = vmul.f32 %v2916, %v2916
      %v2925 = vmul.f32 %v2917, %v2917
      %v2926 = vmul.f32 %v2918, %v2918
      %v2927 = vmul.f32 %v2919, %v2919
      %v2928 = vmul.f32 %v2920, %v2920
      %v2929 = vmul.f32 %v2921, %v2921
      %v2930 = vmul.f32 %v2922, %v2922
      %v2931 = vmul.f32 %v2923, %v2923
      %v2932 = vadd.f32 %v2924, %v2925
      %v2933 = vadd.f32 %v2932, %v2926
      %v2934 = vadd.f32 %v2933, %v2927
      %v2935 = vadd.f32 %v2934, %v2928
      %v2936 = vadd.f32 %v2935, %v2929
      %v2937 = vadd.f32 %v2936, %v2930
      %v2938 = vadd.f32 %v2937, %v2931
      %2939 = vadd.xlane.f32.xlu0 %v2938
      %v2940 = vpop.xlane.xlu0 %2939
      %v2941 = vmax.f32 %v2940, 1e-30
      %v2942 = vrsqrt.pop %v2941
      %v2943 = vmul.f32 %v2916, %v2942
      %v2944 = vmul.f32 %v2917, %v2942
      %v2945 = vmul.f32 %v2918, %v2942
      %v2946 = vmul.f32 %v2919, %v2942
      %v2947 = vmul.f32 %v2920, %v2942
      %v2948 = vmul.f32 %v2921, %v2942
      %v2949 = vmul.f32 %v2922, %v2942
      %v2950 = vmul.f32 %v2923, %v2942
      %v2951 = vpack.c.bf16 %v2943, %v2943
      %v2952 = vpack.c.bf16 %v2944, %v2944
      %v2953 = vpack.c.bf16 %v2945, %v2945
      %v2954 = vpack.c.bf16 %v2946, %v2946
      %v2955 = vpack.c.bf16 %v2947, %v2947
      %v2956 = vpack.c.bf16 %v2948, %v2948
      %v2957 = vpack.c.bf16 %v2949, %v2949
      %v2958 = vpack.c.bf16 %v2950, %v2950
      %v2959 = vld [vmem:[#allocation5] sm:$0xf]
      %v2960 = vld [vmem:[#allocation5 + $0x4] sm:$0xf]
      %v2961 = vld [vmem:[#allocation5 + $0x8] sm:$0xf]
      %v2962 = vld [vmem:[#allocation5 + $0xc] sm:$0xf]
      %v2963 = vld [vmem:[#allocation5 + $0x10] sm:$0xf]
      %v2964 = vld [vmem:[#allocation5 + $0x14] sm:$0xf]
      %v2965 = vld [vmem:[#allocation5 + $0x18] sm:$0xf]
      %v2966 = vld [vmem:[#allocation5 + $0x1c] sm:$0xf]
      %v2967 = vld [vmem:[#allocation5 + $0x20] sm:$0xf]
      %v2968 = vld [vmem:[#allocation5 + $0x24] sm:$0xf]
      %v2969 = vld [vmem:[#allocation5 + $0x28] sm:$0xf]
      %v2970 = vld [vmem:[#allocation5 + $0x2c] sm:$0xf]
      %v2971 = vld [vmem:[#allocation5 + $0x30] sm:$0xf]
      %v2972 = vld [vmem:[#allocation5 + $0x34] sm:$0xf]
      %v2973 = vld [vmem:[#allocation5 + $0x38] sm:$0xf]
      %v2974 = vld [vmem:[#allocation5 + $0x3c] sm:$0xf]
      %v2975 = vld [vmem:[#allocation5 + $0x40] sm:$0xf]
      %v2976 = vld [vmem:[#allocation5 + $0x44] sm:$0xf]
      %v2977 = vld [vmem:[#allocation5 + $0x48] sm:$0xf]
      %v2978 = vld [vmem:[#allocation5 + $0x4c] sm:$0xf]
      %v2979 = vld [vmem:[#allocation5 + $0x50] sm:$0xf]
      %v2980 = vld [vmem:[#allocation5 + $0x54] sm:$0xf]
      %v2981 = vld [vmem:[#allocation5 + $0x58] sm:$0xf]
      %v2982 = vld [vmem:[#allocation5 + $0x5c] sm:$0xf]
      %v2983 = vld [vmem:[#allocation5 + $0x60] sm:$0xf]
      %v2984 = vld [vmem:[#allocation5 + $0x64] sm:$0xf]
      %v2985 = vld [vmem:[#allocation5 + $0x68] sm:$0xf]
      %v2986 = vld [vmem:[#allocation5 + $0x6c] sm:$0xf]
      %v2987 = vld [vmem:[#allocation5 + $0x70] sm:$0xf]
      %v2988 = vld [vmem:[#allocation5 + $0x74] sm:$0xf]
      %v2989 = vld [vmem:[#allocation5 + $0x78] sm:$0xf]
      %v2990 = vld [vmem:[#allocation5 + $0x7c] sm:$0xf]
      %v2991 = vld [vmem:[#allocation5 + $0x80] sm:$0xf]
      %v2992 = vld [vmem:[#allocation5 + $0x84] sm:$0xf]
      %v2993 = vld [vmem:[#allocation5 + $0x88] sm:$0xf]
      %v2994 = vld [vmem:[#allocation5 + $0x8c] sm:$0xf]
      %v2995 = vld [vmem:[#allocation5 + $0x90] sm:$0xf]
      %v2996 = vld [vmem:[#allocation5 + $0x94] sm:$0xf]
      %v2997 = vld [vmem:[#allocation5 + $0x98] sm:$0xf]
      %v2998 = vld [vmem:[#allocation5 + $0x9c] sm:$0xf]
      %v2999 = vld [vmem:[#allocation5 + $0xa0] sm:$0xf]
      %v3000 = vld [vmem:[#allocation5 + $0xa4] sm:$0xf]
      %v3001 = vld [vmem:[#allocation5 + $0xa8] sm:$0xf]
      %v3002 = vld [vmem:[#allocation5 + $0xac] sm:$0xf]
      %v3003 = vld [vmem:[#allocation5 + $0xb0] sm:$0xf]
      %v3004 = vld [vmem:[#allocation5 + $0xb4] sm:$0xf]
      %v3005 = vld [vmem:[#allocation5 + $0xb8] sm:$0xf]
      %v3006 = vld [vmem:[#allocation5 + $0xbc] sm:$0xf]
      %v3007 = vld [vmem:[#allocation5 + $0xc0] sm:$0xf]
      %v3008 = vld [vmem:[#allocation5 + $0xc4] sm:$0xf]
      %v3009 = vld [vmem:[#allocation5 + $0xc8] sm:$0xf]
      %v3010 = vld [vmem:[#allocation5 + $0xcc] sm:$0xf]
      %v3011 = vld [vmem:[#allocation5 + $0xd0] sm:$0xf]
      %v3012 = vld [vmem:[#allocation5 + $0xd4] sm:$0xf]
      %v3013 = vld [vmem:[#allocation5 + $0xd8] sm:$0xf]
      %v3014 = vld [vmem:[#allocation5 + $0xdc] sm:$0xf]
      %v3015 = vld [vmem:[#allocation5 + $0xe0] sm:$0xf]
      %v3016 = vld [vmem:[#allocation5 + $0xe4] sm:$0xf]
      %v3017 = vld [vmem:[#allocation5 + $0xe8] sm:$0xf]
      %v3018 = vld [vmem:[#allocation5 + $0xec] sm:$0xf]
      %v3019 = vld [vmem:[#allocation5 + $0xf0] sm:$0xf]
      %v3020 = vld [vmem:[#allocation5 + $0xf4] sm:$0xf]
      %v3021 = vld [vmem:[#allocation5 + $0xf8] sm:$0xf]
      %v3022 = vld [vmem:[#allocation5 + $0xfc] sm:$0xf]
      %v3023 = vld [vmem:[#allocation5 + $0x100] sm:$0xf]
      %v3024 = vld [vmem:[#allocation5 + $0x104] sm:$0xf]
      %v3025 = vld [vmem:[#allocation5 + $0x108] sm:$0xf]
      %v3026 = vld [vmem:[#allocation5 + $0x10c] sm:$0xf]
      %v3027 = vld [vmem:[#allocation5 + $0x110] sm:$0xf]
      %v3028 = vld [vmem:[#allocation5 + $0x114] sm:$0xf]
      %v3029 = vld [vmem:[#allocation5 + $0x118] sm:$0xf]
      %v3030 = vld [vmem:[#allocation5 + $0x11c] sm:$0xf]
      %v3031 = vld [vmem:[#allocation5 + $0x120] sm:$0xf]
      %v3032 = vld [vmem:[#allocation5 + $0x124] sm:$0xf]
      %v3033 = vld [vmem:[#allocation5 + $0x128] sm:$0xf]
      %v3034 = vld [vmem:[#allocation5 + $0x12c] sm:$0xf]
      %v3035 = vld [vmem:[#allocation5 + $0x130] sm:$0xf]
      %v3036 = vld [vmem:[#allocation5 + $0x134] sm:$0xf]
      %v3037 = vld [vmem:[#allocation5 + $0x138] sm:$0xf]
      %v3038 = vld [vmem:[#allocation5 + $0x13c] sm:$0xf]
      %v3039 = vld [vmem:[#allocation5 + $0x140] sm:$0xf]
      %v3040 = vld [vmem:[#allocation5 + $0x144] sm:$0xf]
      %v3041 = vld [vmem:[#allocation5 + $0x148] sm:$0xf]
      %v3042 = vld [vmem:[#allocation5 + $0x14c] sm:$0xf]
      %v3043 = vld [vmem:[#allocation5 + $0x150] sm:$0xf]
      %v3044 = vld [vmem:[#allocation5 + $0x154] sm:$0xf]
      %v3045 = vld [vmem:[#allocation5 + $0x158] sm:$0xf]
      %v3046 = vld [vmem:[#allocation5 + $0x15c] sm:$0xf]
      %v3047 = vld [vmem:[#allocation5 + $0x160] sm:$0xf]
      %v3048 = vld [vmem:[#allocation5 + $0x164] sm:$0xf]
      %v3049 = vld [vmem:[#allocation5 + $0x168] sm:$0xf]
      %v3050 = vld [vmem:[#allocation5 + $0x16c] sm:$0xf]
      %v3051 = vld [vmem:[#allocation5 + $0x170] sm:$0xf]
      %v3052 = vld [vmem:[#allocation5 + $0x174] sm:$0xf]
      %v3053 = vld [vmem:[#allocation5 + $0x178] sm:$0xf]
      %v3054 = vld [vmem:[#allocation5 + $0x17c] sm:$0xf]
      %v3055 = vld [vmem:[#allocation5 + $0x180] sm:$0xf]
      %v3056 = vld [vmem:[#allocation5 + $0x184] sm:$0xf]
      %v3057 = vld [vmem:[#allocation5 + $0x188] sm:$0xf]
      %v3058 = vld [vmem:[#allocation5 + $0x18c] sm:$0xf]
      %v3059 = vld [vmem:[#allocation5 + $0x190] sm:$0xf]
      %v3060 = vld [vmem:[#allocation5 + $0x194] sm:$0xf]
      %v3061 = vld [vmem:[#allocation5 + $0x198] sm:$0xf]
      %v3062 = vld [vmem:[#allocation5 + $0x19c] sm:$0xf]
      %v3063 = vld [vmem:[#allocation5 + $0x1a0] sm:$0xf]
      %v3064 = vld [vmem:[#allocation5 + $0x1a4] sm:$0xf]
      %v3065 = vld [vmem:[#allocation5 + $0x1a8] sm:$0xf]
      %v3066 = vld [vmem:[#allocation5 + $0x1ac] sm:$0xf]
      %v3067 = vld [vmem:[#allocation5 + $0x1b0] sm:$0xf]
      %v3068 = vld [vmem:[#allocation5 + $0x1b4] sm:$0xf]
      %v3069 = vld [vmem:[#allocation5 + $0x1b8] sm:$0xf]
      %v3070 = vld [vmem:[#allocation5 + $0x1bc] sm:$0xf]
      %v3071 = vld [vmem:[#allocation5 + $0x1c0] sm:$0xf]
      %v3072 = vld [vmem:[#allocation5 + $0x1c4] sm:$0xf]
      %v3073 = vld [vmem:[#allocation5 + $0x1c8] sm:$0xf]
      %v3074 = vld [vmem:[#allocation5 + $0x1cc] sm:$0xf]
      %v3075 = vld [vmem:[#allocation5 + $0x1d0] sm:$0xf]
      %v3076 = vld [vmem:[#allocation5 + $0x1d4] sm:$0xf]
      %v3077 = vld [vmem:[#allocation5 + $0x1d8] sm:$0xf]
      %v3078 = vld [vmem:[#allocation5 + $0x1dc] sm:$0xf]
      %v3079 = vld [vmem:[#allocation5 + $0x1e0] sm:$0xf]
      %v3080 = vld [vmem:[#allocation5 + $0x1e4] sm:$0xf]
      %v3081 = vld [vmem:[#allocation5 + $0x1e8] sm:$0xf]
      %v3082 = vld [vmem:[#allocation5 + $0x1ec] sm:$0xf]
      %v3083 = vld [vmem:[#allocation5 + $0x1f0] sm:$0xf]
      %v3084 = vld [vmem:[#allocation5 + $0x1f4] sm:$0xf]
      %v3085 = vld [vmem:[#allocation5 + $0x1f8] sm:$0xf]
      %v3086 = vld [vmem:[#allocation5 + $0x1fc] sm:$0xf]
      %v3087 = vld [vmem:[#allocation7] sm:$0x1]
      %v3089 = vlaneseq
      %v3090 = vshrl.u32 %v3089, 7
      %v3091 = vsub.s32 0, %v3090
      %v3092 = vrot.slane %v3087, %v3091
      %v3222 = vunpack.c.l.b16 %v2959
      %v3223 = vunpack.c.l.b16 %v2960
      %v3224 = vunpack.c.l.b16 %v2961
      %v3225 = vunpack.c.l.b16 %v2962
      %v3226 = vunpack.c.l.b16 %v2963
      %v3227 = vunpack.c.l.b16 %v2964
      %v3228 = vunpack.c.l.b16 %v2965
      %v3229 = vunpack.c.l.b16 %v2966
      %v3230 = vunpack.c.l.b16 %v2967
      %v3231 = vunpack.c.l.b16 %v2968
      %v3232 = vunpack.c.l.b16 %v2969
      %v3233 = vunpack.c.l.b16 %v2970
      %v3234 = vunpack.c.l.b16 %v2971
      %v3235 = vunpack.c.l.b16 %v2972
      %v3236 = vunpack.c.l.b16 %v2973
      %v3237 = vunpack.c.l.b16 %v2974
      %v3238 = vunpack.c.l.b16 %v2975
      %v3239 = vunpack.c.l.b16 %v2976
      %v3240 = vunpack.c.l.b16 %v2977
      %v3241 = vunpack.c.l.b16 %v2978
      %v3242 = vunpack.c.l.b16 %v2979
      %v3243 = vunpack.c.l.b16 %v2980
      %v3244 = vunpack.c.l.b16 %v2981
      %v3245 = vunpack.c.l.b16 %v2982
      %v3246 = vunpack.c.l.b16 %v2983
      %v3247 = vunpack.c.l.b16 %v2984
      %v3248 = vunpack.c.l.b16 %v2985
      %v3249 = vunpack.c.l.b16 %v2986
      %v3250 = vunpack.c.l.b16 %v2987
      %v3251 = vunpack.c.l.b16 %v2988
      %v3252 = vunpack.c.l.b16 %v2989
      %v3253 = vunpack.c.l.b16 %v2990
      %v3254 = vunpack.c.l.b16 %v2991
      %v3255 = vunpack.c.l.b16 %v2992
      %v3256 = vunpack.c.l.b16 %v2993
      %v3257 = vunpack.c.l.b16 %v2994
      %v3258 = vunpack.c.l.b16 %v2995
      %v3259 = vunpack.c.l.b16 %v2996
      %v3260 = vunpack.c.l.b16 %v2997
      %v3261 = vunpack.c.l.b16 %v2998
      %v3262 = vunpack.c.l.b16 %v2999
      %v3263 = vunpack.c.l.b16 %v3000
      %v3264 = vunpack.c.l.b16 %v3001
      %v3265 = vunpack.c.l.b16 %v3002
      %v3266 = vunpack.c.l.b16 %v3003
      %v3267 = vunpack.c.l.b16 %v3004
      %v3268 = vunpack.c.l.b16 %v3005
      %v3269 = vunpack.c.l.b16 %v3006
      %v3270 = vunpack.c.l.b16 %v3007
      %v3271 = vunpack.c.l.b16 %v3008
      %v3272 = vunpack.c.l.b16 %v3009
      %v3273 = vunpack.c.l.b16 %v3010
      %v3274 = vunpack.c.l.b16 %v3011
      %v3275 = vunpack.c.l.b16 %v3012
      %v3276 = vunpack.c.l.b16 %v3013
      %v3277 = vunpack.c.l.b16 %v3014
      %v3278 = vunpack.c.l.b16 %v3015
      %v3279 = vunpack.c.l.b16 %v3016
      %v3280 = vunpack.c.l.b16 %v3017
      %v3281 = vunpack.c.l.b16 %v3018
      %v3282 = vunpack.c.l.b16 %v3019
      %v3283 = vunpack.c.l.b16 %v3020
      %v3284 = vunpack.c.l.b16 %v3021
      %v3285 = vunpack.c.l.b16 %v3022
      %v3286 = vunpack.c.l.b16 %v3023
      %v3287 = vunpack.c.l.b16 %v3024
      %v3288 = vunpack.c.l.b16 %v3025
      %v3289 = vunpack.c.l.b16 %v3026
      %v3290 = vunpack.c.l.b16 %v3027
      %v3291 = vunpack.c.l.b16 %v3028
      %v3292 = vunpack.c.l.b16 %v3029
      %v3293 = vunpack.c.l.b16 %v3030
      %v3294 = vunpack.c.l.b16 %v3031
      %v3295 = vunpack.c.l.b16 %v3032
      %v3296 = vunpack.c.l.b16 %v3033
      %v3297 = vunpack.c.l.b16 %v3034
      %v3298 = vunpack.c.l.b16 %v3035
      %v3299 = vunpack.c.l.b16 %v3036
      %v3300 = vunpack.c.l.b16 %v3037
      %v3301 = vunpack.c.l.b16 %v3038
      %v3302 = vunpack.c.l.b16 %v3039
      %v3303 = vunpack.c.l.b16 %v3040
      %v3304 = vunpack.c.l.b16 %v3041
      %v3305 = vunpack.c.l.b16 %v3042
      %v3306 = vunpack.c.l.b16 %v3043
      %v3307 = vunpack.c.l.b16 %v3044
      %v3308 = vunpack.c.l.b16 %v3045
      %v3309 = vunpack.c.l.b16 %v3046
      %v3310 = vunpack.c.l.b16 %v3047
      %v3311 = vunpack.c.l.b16 %v3048
      %v3312 = vunpack.c.l.b16 %v3049
      %v3313 = vunpack.c.l.b16 %v3050
      %v3314 = vunpack.c.l.b16 %v3051
      %v3315 = vunpack.c.l.b16 %v3052
      %v3316 = vunpack.c.l.b16 %v3053
      %v3317 = vunpack.c.l.b16 %v3054
      %v3318 = vunpack.c.l.b16 %v3055
      %v3319 = vunpack.c.l.b16 %v3056
      %v3320 = vunpack.c.l.b16 %v3057
      %v3321 = vunpack.c.l.b16 %v3058
      %v3322 = vunpack.c.l.b16 %v3059
      %v3323 = vunpack.c.l.b16 %v3060
      %v3324 = vunpack.c.l.b16 %v3061
      %v3325 = vunpack.c.l.b16 %v3062
      %v3326 = vunpack.c.l.b16 %v3063
      %v3327 = vunpack.c.l.b16 %v3064
      %v3328 = vunpack.c.l.b16 %v3065
      %v3329 = vunpack.c.l.b16 %v3066
      %v3330 = vunpack.c.l.b16 %v3067
      %v3331 = vunpack.c.l.b16 %v3068
      %v3332 = vunpack.c.l.b16 %v3069
      %v3333 = vunpack.c.l.b16 %v3070
      %v3334 = vunpack.c.l.b16 %v3071
      %v3335 = vunpack.c.l.b16 %v3072
      %v3336 = vunpack.c.l.b16 %v3073
      %v3337 = vunpack.c.l.b16 %v3074
      %v3338 = vunpack.c.l.b16 %v3075
      %v3339 = vunpack.c.l.b16 %v3076
      %v3340 = vunpack.c.l.b16 %v3077
      %v3341 = vunpack.c.l.b16 %v3078
      %v3342 = vunpack.c.l.b16 %v3079
      %v3343 = vunpack.c.l.b16 %v3080
      %v3344 = vunpack.c.l.b16 %v3081
      %v3345 = vunpack.c.l.b16 %v3082
      %v3346 = vunpack.c.l.b16 %v3083
      %v3347 = vunpack.c.l.b16 %v3084
      %v3348 = vunpack.c.l.b16 %v3085
      %v3349 = vunpack.c.l.b16 %v3086
      %v3350 = vpack.c.b16 %v3223, %v3222
      %v3351 = vpack.c.b16 %v3225, %v3224
      %v3352 = vpack.c.b16 %v3227, %v3226
      %v3353 = vpack.c.b16 %v3229, %v3228
      %v3354 = vpack.c.b16 %v3231, %v3230
      %v3355 = vpack.c.b16 %v3233, %v3232
      %v3356 = vpack.c.b16 %v3235, %v3234
      %v3357 = vpack.c.b16 %v3237, %v3236
      %v3358 = vpack.c.b16 %v3239, %v3238
      %v3359 = vpack.c.b16 %v3241, %v3240
      %v3360 = vpack.c.b16 %v3243, %v3242
      %v3361 = vpack.c.b16 %v3245, %v3244
      %v3362 = vpack.c.b16 %v3247, %v3246
      %v3363 = vpack.c.b16 %v3249, %v3248
      %v3364 = vpack.c.b16 %v3251, %v3250
      %v3365 = vpack.c.b16 %v3253, %v3252
      %v3366 = vpack.c.b16 %v3255, %v3254
      %v3367 = vpack.c.b16 %v3257, %v3256
      %v3368 = vpack.c.b16 %v3259, %v3258
      %v3369 = vpack.c.b16 %v3261, %v3260
      %v3370 = vpack.c.b16 %v3263, %v3262
      %v3371 = vpack.c.b16 %v3265, %v3264
      %v3372 = vpack.c.b16 %v3267, %v3266
      %v3373 = vpack.c.b16 %v3269, %v3268
      %v3374 = vpack.c.b16 %v3271, %v3270
      %v3375 = vpack.c.b16 %v3273, %v3272
      %v3376 = vpack.c.b16 %v3275, %v3274
      %v3377 = vpack.c.b16 %v3277, %v3276
      %v3378 = vpack.c.b16 %v3279, %v3278
      %v3379 = vpack.c.b16 %v3281, %v3280
      %v3380 = vpack.c.b16 %v3283, %v3282
      %v3381 = vpack.c.b16 %v3285, %v3284
      %v3382 = vpack.c.b16 %v3287, %v3286
      %v3383 = vpack.c.b16 %v3289, %v3288
      %v3384 = vpack.c.b16 %v3291, %v3290
      %v3385 = vpack.c.b16 %v3293, %v3292
      %v3386 = vpack.c.b16 %v3295, %v3294
      %v3387 = vpack.c.b16 %v3297, %v3296
      %v3388 = vpack.c.b16 %v3299, %v3298
      %v3389 = vpack.c.b16 %v3301, %v3300
      %v3390 = vpack.c.b16 %v3303, %v3302
      %v3391 = vpack.c.b16 %v3305, %v3304
      %v3392 = vpack.c.b16 %v3307, %v3306
      %v3393 = vpack.c.b16 %v3309, %v3308
      %v3394 = vpack.c.b16 %v3311, %v3310
      %v3395 = vpack.c.b16 %v3313, %v3312
      %v3396 = vpack.c.b16 %v3315, %v3314
      %v3397 = vpack.c.b16 %v3317, %v3316
      %v3398 = vpack.c.b16 %v3319, %v3318
      %v3399 = vpack.c.b16 %v3321, %v3320
      %v3400 = vpack.c.b16 %v3323, %v3322
      %v3401 = vpack.c.b16 %v3325, %v3324
      %v3402 = vpack.c.b16 %v3327, %v3326
      %v3403 = vpack.c.b16 %v3329, %v3328
      %v3404 = vpack.c.b16 %v3331, %v3330
      %v3405 = vpack.c.b16 %v3333, %v3332
      %v3406 = vpack.c.b16 %v3335, %v3334
      %v3407 = vpack.c.b16 %v3337, %v3336
      %v3408 = vpack.c.b16 %v3339, %v3338
      %v3409 = vpack.c.b16 %v3341, %v3340
      %v3410 = vpack.c.b16 %v3343, %v3342
      %v3411 = vpack.c.b16 %v3345, %v3344
      %v3412 = vpack.c.b16 %v3347, %v3346
      %v3413 = vpack.c.b16 %v3349, %v3348
      %3478 = vmatprep.subr.bf16.mxu0 0
      %3479 = vmatpush1.bf16.msra.mxu0 %v3350
      %3480 = vmatprep.subr.bf16.mxu0 0
      %3481 = vmatpush1.bf16.msra.mxu0 %v3351
      %3482 = vmatprep.subr.bf16.mxu0 0
      %3483 = vmatpush1.bf16.msra.mxu0 %v3352
      %3484 = vmatprep.subr.bf16.mxu0 0
      %3485 = vmatpush1.bf16.msra.mxu0 %v3353
      %3486 = vmatprep.subr.bf16.mxu0 0
      %3487 = vmatpush1.bf16.msra.mxu0 %v3354
      %3488 = vmatprep.subr.bf16.mxu0 0
      %3489 = vmatpush1.bf16.msra.mxu0 %v3355
      %3490 = vmatprep.subr.bf16.mxu0 0
      %3491 = vmatpush1.bf16.msra.mxu0 %v3356
      %3492 = vmatprep.subr.bf16.mxu0 0
      %3493 = vmatpush1.bf16.msra.mxu0 %v3357
      %3494 = vmatprep.subr.bf16.mxu0 0
      %3495 = vmatpush1.bf16.msra.mxu0 %v3358
      %3496 = vmatprep.subr.bf16.mxu0 0
      %3497 = vmatpush1.bf16.msra.mxu0 %v3359
      %3498 = vmatprep.subr.bf16.mxu0 0
      %3499 = vmatpush1.bf16.msra.mxu0 %v3360
      %3500 = vmatprep.subr.bf16.mxu0 0
      %3501 = vmatpush1.bf16.msra.mxu0 %v3361
      %3502 = vmatprep.subr.bf16.mxu0 0
      %3503 = vmatpush1.bf16.msra.mxu0 %v3362
      %3504 = vmatprep.subr.bf16.mxu0 0
      %3505 = vmatpush1.bf16.msra.mxu0 %v3363
      %3506 = vmatprep.subr.bf16.mxu0 0
      %3507 = vmatpush1.bf16.msra.mxu0 %v3364
      %3508 = vmatprep.subr.bf16.mxu0 0
      %3509 = vmatpush1.bf16.msra.mxu0 %v3365
      %3510 = vmatprep.mubr.bf16.mxu0 %v2952
      %3511 = vmatmul.mubr.bf16.gmra.mrb[0].mxu0 %v2951
      %v3512 = vpop.f32.mrb[0].mxu0
      %v3513 = vadd.f32 %v3092, %v3512
      %v3514 = vpop.f32.mrb[0].mxu0
      %v3515 = vpop.f32.mrb[0].mxu0
      %v3516 = vpop.f32.mrb[0].mxu0
      %3517 = vdwg.mxu0
      %3518 = vmatprep.subr.bf16.mxu0 0
      %3519 = vmatpush1.bf16.msra.mxu0 %v3366
      %3520 = vmatprep.subr.bf16.mxu0 0
      %3521 = vmatpush1.bf16.msra.mxu0 %v3367
      %3522 = vmatprep.subr.bf16.mxu0 0
      %3523 = vmatpush1.bf16.msra.mxu0 %v3368
      %3524 = vmatprep.subr.bf16.mxu0 0
      %3525 = vmatpush1.bf16.msra.mxu0 %v3369
      %3526 = vmatprep.subr.bf16.mxu0 0
      %3527 = vmatpush1.bf16.msra.mxu0 %v3370
      %3528 = vmatprep.subr.bf16.mxu0 0
      %3529 = vmatpush1.bf16.msra.mxu0 %v3371
      %3530 = vmatprep.subr.bf16.mxu0 0
      %3531 = vmatpush1.bf16.msra.mxu0 %v3372
      %3532 = vmatprep.subr.bf16.mxu0 0
      %3533 = vmatpush1.bf16.msra.mxu0 %v3373
      %3534 = vmatprep.subr.bf16.mxu0 0
      %3535 = vmatpush1.bf16.msra.mxu0 %v3374
      %3536 = vmatprep.subr.bf16.mxu0 0
      %3537 = vmatpush1.bf16.msra.mxu0 %v3375
      %3538 = vmatprep.subr.bf16.mxu0 0
      %3539 = vmatpush1.bf16.msra.mxu0 %v3376
      %3540 = vmatprep.subr.bf16.mxu0 0
      %3541 = vmatpush1.bf16.msra.mxu0 %v3377
      %3542 = vmatprep.subr.bf16.mxu0 0
      %3543 = vmatpush1.bf16.msra.mxu0 %v3378
      %3544 = vmatprep.subr.bf16.mxu0 0
      %3545 = vmatpush1.bf16.msra.mxu0 %v3379
      %3546 = vmatprep.subr.bf16.mxu0 0
      %3547 = vmatpush1.bf16.msra.mxu0 %v3380
      %3548 = vmatprep.subr.bf16.mxu0 0
      %3549 = vmatpush1.bf16.msra.mxu0 %v3381
      %3550 = vmatprep.mubr.bf16.mxu0 %v2954
      %3551 = vmatmul.mubr.bf16.gmra.mrb[0].mxu0 %v2953
      %v3552 = vpop.f32.mrb[0].mxu0
      %v3553 = vadd.f32 %v3513, %v3552
      %v3554 = vpop.f32.mrb[0].mxu0
      %v3555 = vpop.f32.mrb[0].mxu0
      %v3556 = vpop.f32.mrb[0].mxu0
      %3557 = vdwg.mxu0
      %3558 = vmatprep.subr.bf16.mxu0 0
      %3559 = vmatpush1.bf16.msra.mxu0 %v3382
      %3560 = vmatprep.subr.bf16.mxu0 0
      %3561 = vmatpush1.bf16.msra.mxu0 %v3383
      %3562 = vmatprep.subr.bf16.mxu0 0
      %3563 = vmatpush1.bf16.msra.mxu0 %v3384
      %3564 = vmatprep.subr.bf16.mxu0 0
      %3565 = vmatpush1.bf16.msra.mxu0 %v3385
      %3566 = vmatprep.subr.bf16.mxu0 0
      %3567 = vmatpush1.bf16.msra.mxu0 %v3386
      %3568 = vmatprep.subr.bf16.mxu0 0
      %3569 = vmatpush1.bf16.msra.mxu0 %v3387
      %3570 = vmatprep.subr.bf16.mxu0 0
      %3571 = vmatpush1.bf16.msra.mxu0 %v3388
      %3572 = vmatprep.subr.bf16.mxu0 0
      %3573 = vmatpush1.bf16.msra.mxu0 %v3389
      %3574 = vmatprep.subr.bf16.mxu0 0
      %3575 = vmatpush1.bf16.msra.mxu0 %v3390
      %3576 = vmatprep.subr.bf16.mxu0 0
      %3577 = vmatpush1.bf16.msra.mxu0 %v3391
      %3578 = vmatprep.subr.bf16.mxu0 0
      %3579 = vmatpush1.bf16.msra.mxu0 %v3392
      %3580 = vmatprep.subr.bf16.mxu0 0
      %3581 = vmatpush1.bf16.msra.mxu0 %v3393
      %3582 = vmatprep.subr.bf16.mxu0 0
      %3583 = vmatpush1.bf16.msra.mxu0 %v3394
      %3584 = vmatprep.subr.bf16.mxu0 0
      %3585 = vmatpush1.bf16.msra.mxu0 %v3395
      %3586 = vmatprep.subr.bf16.mxu0 0
      %3587 = vmatpush1.bf16.msra.mxu0 %v3396
      %3588 = vmatprep.subr.bf16.mxu0 0
      %3589 = vmatpush1.bf16.msra.mxu0 %v3397
      %3590 = vmatprep.mubr.bf16.mxu0 %v2956
      %3591 = vmatmul.mubr.bf16.gmra.mrb[0].mxu0 %v2955
      %v3592 = vpop.f32.mrb[0].mxu0
      %v3593 = vadd.f32 %v3553, %v3592
      %v3594 = vpop.f32.mrb[0].mxu0
      %v3595 = vpop.f32.mrb[0].mxu0
      %v3596 = vpop.f32.mrb[0].mxu0
      %3597 = vdwg.mxu0
      %3598 = vmatprep.subr.bf16.mxu0 0
      %3599 = vmatpush1.bf16.msra.mxu0 %v3398
      %3600 = vmatprep.subr.bf16.mxu0 0
      %3601 = vmatpush1.bf16.msra.mxu0 %v3399
      %3602 = vmatprep.subr.bf16.mxu0 0
      %3603 = vmatpush1.bf16.msra.mxu0 %v3400
      %3604 = vmatprep.subr.bf16.mxu0 0
      %3605 = vmatpush1.bf16.msra.mxu0 %v3401
      %3606 = vmatprep.subr.bf16.mxu0 0
      %3607 = vmatpush1.bf16.msra.mxu0 %v3402
      %3608 = vmatprep.subr.bf16.mxu0 0
      %3609 = vmatpush1.bf16.msra.mxu0 %v3403
      %3610 = vmatprep.subr.bf16.mxu0 0
      %3611 = vmatpush1.bf16.msra.mxu0 %v3404
      %3612 = vmatprep.subr.bf16.mxu0 0
      %3613 = vmatpush1.bf16.msra.mxu0 %v3405
      %3614 = vmatprep.subr.bf16.mxu0 0
      %3615 = vmatpush1.bf16.msra.mxu0 %v3406
      %3616 = vmatprep.subr.bf16.mxu0 0
      %3617 = vmatpush1.bf16.msra.mxu0 %v3407
      %3618 = vmatprep.subr.bf16.mxu0 0
      %3619 = vmatpush1.bf16.msra.mxu0 %v3408
      %3620 = vmatprep.subr.bf16.mxu0 0
      %3621 = vmatpush1.bf16.msra.mxu0 %v3409
      %3622 = vmatprep.subr.bf16.mxu0 0
      %3623 = vmatpush1.bf16.msra.mxu0 %v3410
      %3624 = vmatprep.subr.bf16.mxu0 0
      %3625 = vmatpush1.bf16.msra.mxu0 %v3411
      %3626 = vmatprep.subr.bf16.mxu0 0
      %3627 = vmatpush1.bf16.msra.mxu0 %v3412
      %3628 = vmatprep.subr.bf16.mxu0 0
      %3629 = vmatpush1.bf16.msra.mxu0 %v3413
      %3630 = vmatprep.mubr.bf16.mxu0 %v2958
      %3631 = vmatmul.mubr.bf16.gmra.mrb[0].mxu0 %v2957
      %v3632 = vpop.f32.mrb[0].mxu0
      %v3633 = vadd.f32 %v3593, %v3632
      %v3634 = vpop.f32.mrb[0].mxu0
      %v3635 = vpop.f32.mrb[0].mxu0
      %v3636 = vpop.f32.mrb[0].mxu0
      %3637 = vdwg.mxu0
      %3638 = vst [vmem:[%s4] sm:$0xff] %v3633
    $region37: #{clip_classifier_forward.1} parent=1 // pred_fallthru
      _
    // Predicated region
    $region38: #{clip_classifier_forward.1} parent=1 // pred_check
      _
    $region39: #{clip_classifier_forward.1} parent=1 // pred_check_branch
      %3640 = sbr.rel (0) target = $region41
    $region40: #{clip_classifier_forward.1} parent=1 // pred_region
      _
    $region41: #{clip_classifier_forward.1} parent=1 // pred_fallthru
      _
    // Predicated region
    $region42: #{clip_classifier_forward.1} parent=1 // pred_check
      _
    $region43: #{clip_classifier_forward.1} parent=1 // pred_check_branch
      %3642 = sbr.rel (0) target = $region45
    $region44: #{clip_classifier_forward.1} parent=1 // pred_region
      _
    $region45: #{clip_classifier_forward.1} parent=1 // pred_fallthru
      _
    %3643 = vsyncpa [#allocation4], 1
    %3644 = vsyncpa [#allocation6], 1

</llo_original>
